<compile_context>
chip_gen: v7x
topology: tpu7x:2x2x1
jax: 0.10.0
libtpu: 0.0.40
codegen_flags: <defaults>
</compile_context>

<pallas_src>
import functools
import math

import jax
import jax.numpy as jnp
from jax.experimental import pallas as pl
from jax.experimental.pallas import tpu as pltpu

LANE = 128   # lane width (last-dim tiling unit)
SUB = 8      # sublane width (second-to-last-dim tiling unit)


def _round_up(x, m):
    return ((x + m - 1) // m) * m


def _elu(x):
    # ELU with alpha=1.0 (torch.nn.ELU()): x if x > 0 else exp(x) - 1.
    # (jnp.where discards the exp branch for x > 0; forward-only, so no
    #  overflow guard needed.)
    return jnp.where(x > 0, x, jnp.exp(x) - 1.0)


# -----------------------------------------------------------------------------
# Parameter packing: one lane-padded slab holding all layers (W rows + bias row)
# -----------------------------------------------------------------------------
def pack_params(params, in_features, final_col_offset=0, dtype=jnp.float32):
    """params: flat [W0, b0, W1, b1, ...] with W (din, dout), b (dout,).

    Layer i occupies rows [off_i, off_i + k_i) (zero-padded weight) plus the
    bias row at off_i + k_i; all layers share the same lane-padded width wpad.
    The FINAL layer's columns are placed at [final_col_offset :
    final_col_offset + dout_last], so its output lands in lanes disjoint from
    the latent layer's lanes [0:latent_dim] and the two results can share one
    output slab with a plain add in the kernel.

    Returns (slab, meta, wpad) where meta is a tuple of (row_offset, k_i).
    """
    n_layers = len(params) // 2
    douts = [int(params[2 * i].shape[1]) for i in range(n_layers)]
    wpad = _round_up(max(douts + [final_col_offset + douts[-1]]), LANE)
    in0_pad = _round_up(in_features, SUB)
    kdims = [in0_pad] + [wpad] * (n_layers - 1)

    offsets, rows = [], 0
    for k in kdims:
        offsets.append(rows)
        rows += k + SUB  # k weight rows + 1 bias row, padded to a multiple of 8

    slab = jnp.zeros((rows, wpad), jnp.float32)
    for i in range(n_layers):
        W = params[2 * i].astype(jnp.float32)
        b = params[2 * i + 1].reshape(-1).astype(jnp.float32)
        din, dout = W.shape
        off = offsets[i]
        col = final_col_offset if i == n_layers - 1 else 0
        slab = slab.at[off:off + din, col:col + dout].set(W)
        slab = slab.at[off + kdims[i], col:col + dout].set(b)

    meta = tuple(zip(offsets, kdims))
    return slab.astype(dtype), meta, wpad


# -----------------------------------------------------------------------------
# Kernel: one batch tile through the whole MLP, weights resident in VMEM
# -----------------------------------------------------------------------------
def _cv_learner_kernel(meta, n_enc, n_dec, x_ref, p_ref, out_ref):
    h = x_ref[...].astype(jnp.float32)   # (TB, Fp)
    latent_h = None
    for li, (off, k) in enumerate(meta):
        w = p_ref[off:off + k, :]                        # (k, wpad), aligned slice
        b = p_ref[off + k:off + k + 1, :].astype(jnp.float32)   # (1, wpad) bias row
        h = jnp.dot(h.astype(p_ref.dtype), w,
                    preferred_element_type=jnp.float32) + b
        if li < n_enc or (n_enc < li <= n_enc + n_dec):
            h = _elu(h)                                  # encoder / decoder hidden
        if li == n_enc:                                  # latent layer (no act.)
            latent_h = h
    # latent occupies lanes [0:latent_dim], reconstruction occupies lanes
    # [latent_dim:latent_dim+3] (column-shifted final weights); all other
    # lanes of both are exactly zero, so a single add merges them.
    out_ref[...] = (latent_h + h).astype(out_ref.dtype)


# -----------------------------------------------------------------------------
# Forward factory (jit-compiled; slab packed once at init and reused)
# -----------------------------------------------------------------------------
def make_cv_learner_forward(meta, wpad, latent_dim, n_enc, n_dec, *,
                            target_steps=2, max_block_b=1024):
    """Returns a jitted fn(x, slab) -> (latent (B, latent_dim), recon (B, 3)).

    target_steps: desired number of grid steps.  2 keeps serial-grid overhead
    tiny on the single-core v5e/v6e while giving v7x's two TensorCores one
    step each (grid axis is marked "parallel").
    """
    in0_pad = meta[0][1]

    def fwd(x, slab):
        B, F = x.shape
        # pad feature dim to match the (zero-padded) first weight block
        if F < in0_pad:
            x = jnp.pad(x, ((0, 0), (0, in0_pad - F)))
        Fp = x.shape[1]

        # batch tiling: aim for `target_steps` grid steps (VMEM is never the
        # constraint here; per-step footprint is < 2 MiB even at TB=1024)
        TB = _round_up(max((B + target_steps - 1) // target_steps, SUB), SUB)
        TB = min(TB, max_block_b)
        B_pad = _round_up(B, TB)
        if B_pad > B:
            x = jnp.pad(x, ((0, B_pad - B), (0, 0)))
        grid = (B_pad // TB,)

        kernel = functools.partial(_cv_learner_kernel, meta, n_enc, n_dec)

        out = pl.pallas_call(
            kernel,
            grid=grid,
            in_specs=[
                pl.BlockSpec((TB, Fp), lambda i: (i, 0)),    # activations stream
                # packed params: constant block index -> fetched once, stays
                # VMEM-resident across the grid
                pl.BlockSpec(slab.shape, lambda i: (0, 0)),
            ],
            out_specs=pl.BlockSpec((TB, wpad), lambda i: (i, 0)),  # lane-dense
            out_shape=jax.ShapeDtypeStruct((B_pad, wpad), jnp.float32),
            compiler_params=pltpu.CompilerParams(
                dimension_semantics=("parallel",)),          # v7x: 2 TCs split grid
        )(x, slab)

        latent = out[:B, :latent_dim]
        recon = out[:B, latent_dim:latent_dim + 3]
        return latent, recon

    return jax.jit(fwd)


# -----------------------------------------------------------------------------
# Init + pure-JAX reference
# -----------------------------------------------------------------------------
def init_params(key, in_features, hidden_dims, latent_dim):
    """Flat list mirroring the torch module: encoder layers, latent layer,
    decoder layers (reversed hidden dims), final layer (-> 3)."""
    dims = []
    cin = in_features
    for h in hidden_dims:
        dims.append((cin, h))
        cin = h
    dims.append((hidden_dims[-1], latent_dim))
    rev = list(reversed(hidden_dims))
    cin = latent_dim
    for h in rev:
        dims.append((cin, h))
        cin = h
    dims.append((rev[-1], 3))

    params = []
    for (din, dout) in dims:
        key, kw, kb = jax.random.split(key, 3)
        scale = math.sqrt(2.0 / din)
        W = jax.random.normal(kw, (din, dout), dtype=jnp.float32) * scale
        b = jax.random.normal(kb, (dout,), dtype=jnp.float32) * 0.01
        params += [W, b]
    return params


def reference_forward(x, params, n_enc, n_dec):
    idx = 0
    h = x
    for _ in range(n_enc):
        h = _elu(h @ params[idx] + params[idx + 1])
        idx += 2
    latent = h @ params[idx] + params[idx + 1]
    idx += 2
    d = latent
    for _ in range(n_dec):
        d = _elu(d @ params[idx] + params[idx + 1])
        idx += 2
    recon = d @ params[idx] + params[idx + 1]
    return latent, recon


if __name__ == "__main__":
    # Module config: input_shape=(4, 16) -> 64 flattened features,
    # hidden_dims=[32, 16], latent_dim=2.  Batch 512 exercises the 2-step
    # batch grid (TB=256 per step).
    input_shape = (4, 16)
    in_features = int(input_shape[0] * input_shape[1])
    hidden_dims = [32, 16]
    latent_dim = 2
    batch = 512

    key = jax.random.PRNGKey(0)
    key, kx = jax.random.split(key)
    x = jax.random.normal(kx, (batch, in_features), dtype=jnp.float32)

    params = init_params(key, in_features, hidden_dims, latent_dim)
    n_enc = len(hidden_dims)
    n_dec = len(hidden_dims)

    # Pack parameters ONCE at init (cached slab, reused every call).  The
    # final layer's columns are offset by latent_dim so latent + recon share
    # a single lane-dense output slab.
    slab, meta, wpad = pack_params(params, in_features,
                                   final_col_offset=latent_dim)
    assert latent_dim + 3 <= wpad

    fwd = make_cv_learner_forward(meta, wpad, latent_dim, n_enc, n_dec,
                                  target_steps=2)

    latent, recon = fwd(x, slab)
    jax.block_until_ready((latent, recon))

    # sanity check against pure-JAX reference
    ref_latent, ref_recon = reference_forward(x, params, n_enc, n_dec)
    assert latent.shape == (batch, latent_dim)
    assert recon.shape == (batch, 3)
    assert jnp.allclose(latent, ref_latent, atol=1e-4, rtol=1e-4)
    assert jnp.allclose(recon, ref_recon, atol=1e-4, rtol=1e-4)

    print("KERNEL_OK")
</pallas_src>

<mosaic_0001>
module attributes {stable_mosaic.version = 11 : i64} {
  func.func @_cv_learner_kernel(%arg0: i32, %arg1: memref<256x64xf32, #tpu.memory_space<vmem>>, %arg2: memref<752x128xf32, #tpu.memory_space<vmem>>, %arg3: memref<256x128xf32, #tpu.memory_space<vmem>>) attributes {dimension_semantics = [#tpu.dimension_semantics<parallel>], iteration_bounds = array<i64: 2>, scalar_prefetch = 0 : i64, scratch_operands = 0 : i64, tpu.core_type = #tpu.core_type<tc>, window_params = [{transform_indices = @transform_0, window_bounds = array<i64: 256, 64>}, {pipeline_mode = #tpu.pipeline_mode<synchronous>, transform_indices = @transform_1, window_bounds = array<i64: 752, 128>}, {transform_indices = @transform_2, window_bounds = array<i64: 256, 128>}]} {
    %c0 = arith.constant 0 : index
    %c0_0 = arith.constant 0 : index
    %0 = vector.load %arg1[%c0, %c0_0] : memref<256x64xf32, #tpu.memory_space<vmem>>, vector<256x64xf32>
    %c0_1 = arith.constant 0 : index
    %c0_2 = arith.constant 0 : index
    %1 = vector.load %arg2[%c0_1, %c0_2] : memref<752x128xf32, #tpu.memory_space<vmem>>, vector<64x128xf32>
    %c64 = arith.constant 64 : index
    %c0_3 = arith.constant 0 : index
    %2 = vector.load %arg2[%c64, %c0_3] : memref<752x128xf32, #tpu.memory_space<vmem>>, vector<1x128xf32>
    %cst = arith.constant dense<0.000000e+00> : vector<256x128xf32>
    %3 = tpu.matmul %0, %1, %cst {dimension_numbers = #tpu.dot_dimension_numbers<[1], [0], [0], [1], [0, 0, 1, 1], [], []>} : vector<256x64xf32>, vector<64x128xf32>, vector<256x128xf32> -> vector<256x128xf32>
    %4 = vector.broadcast %2 : vector<1x128xf32> to vector<256x128xf32>
    %5 = arith.addf %3, %4 : vector<256x128xf32>
    %cst_4 = arith.constant 0.000000e+00 : f32
    %6 = vector.broadcast %cst_4 : f32 to vector<256x128xf32>
    %7 = arith.cmpf ogt, %5, %6 : vector<256x128xf32>
    %8 = math.exp %5 : vector<256x128xf32>
    %cst_5 = arith.constant 1.000000e+00 : f32
    %9 = vector.broadcast %cst_5 : f32 to vector<256x128xf32>
    %10 = arith.subf %8, %9 : vector<256x128xf32>
    %11 = arith.select %7, %5, %10 : vector<256x128xi1>, vector<256x128xf32>
    %c72 = arith.constant 72 : index
    %c0_6 = arith.constant 0 : index
    %12 = vector.load %arg2[%c72, %c0_6] : memref<752x128xf32, #tpu.memory_space<vmem>>, vector<128x128xf32>
    %c200 = arith.constant 200 : index
    %c0_7 = arith.constant 0 : index
    %13 = vector.load %arg2[%c200, %c0_7] : memref<752x128xf32, #tpu.memory_space<vmem>>, vector<1x128xf32>
    %cst_8 = arith.constant dense<0.000000e+00> : vector<256x128xf32>
    %14 = tpu.matmul %11, %12, %cst_8 {dimension_numbers = #tpu.dot_dimension_numbers<[1], [0], [0], [1], [0, 0, 1, 1], [], []>} : vector<256x128xf32>, vector<128x128xf32>, vector<256x128xf32> -> vector<256x128xf32>
    %15 = vector.broadcast %13 : vector<1x128xf32> to vector<256x128xf32>
    %16 = arith.addf %14, %15 : vector<256x128xf32>
    %cst_9 = arith.constant 0.000000e+00 : f32
    %17 = vector.broadcast %cst_9 : f32 to vector<256x128xf32>
    %18 = arith.cmpf ogt, %16, %17 : vector<256x128xf32>
    %19 = math.exp %16 : vector<256x128xf32>
    %cst_10 = arith.constant 1.000000e+00 : f32
    %20 = vector.broadcast %cst_10 : f32 to vector<256x128xf32>
    %21 = arith.subf %19, %20 : vector<256x128xf32>
    %22 = arith.select %18, %16, %21 : vector<256x128xi1>, vector<256x128xf32>
    %c208 = arith.constant 208 : index
    %c0_11 = arith.constant 0 : index
    %23 = vector.load %arg2[%c208, %c0_11] : memref<752x128xf32, #tpu.memory_space<vmem>>, vector<128x128xf32>
    %c336 = arith.constant 336 : index
    %c0_12 = arith.constant 0 : index
    %24 = vector.load %arg2[%c336, %c0_12] : memref<752x128xf32, #tpu.memory_space<vmem>>, vector<1x128xf32>
    %cst_13 = arith.constant dense<0.000000e+00> : vector<256x128xf32>
    %25 = tpu.matmul %22, %23, %cst_13 {dimension_numbers = #tpu.dot_dimension_numbers<[1], [0], [0], [1], [0, 0, 1, 1], [], []>} : vector<256x128xf32>, vector<128x128xf32>, vector<256x128xf32> -> vector<256x128xf32>
    %26 = vector.broadcast %24 : vector<1x128xf32> to vector<256x128xf32>
    %27 = arith.addf %25, %26 : vector<256x128xf32>
    %c344 = arith.constant 344 : index
    %c0_14 = arith.constant 0 : index
    %28 = vector.load %arg2[%c344, %c0_14] : memref<752x128xf32, #tpu.memory_space<vmem>>, vector<128x128xf32>
    %c472 = arith.constant 472 : index
    %c0_15 = arith.constant 0 : index
    %29 = vector.load %arg2[%c472, %c0_15] : memref<752x128xf32, #tpu.memory_space<vmem>>, vector<1x128xf32>
    %cst_16 = arith.constant dense<0.000000e+00> : vector<256x128xf32>
    %30 = tpu.matmul %27, %28, %cst_16 {dimension_numbers = #tpu.dot_dimension_numbers<[1], [0], [0], [1], [0, 0, 1, 1], [], []>} : vector<256x128xf32>, vector<128x128xf32>, vector<256x128xf32> -> vector<256x128xf32>
    %31 = vector.broadcast %29 : vector<1x128xf32> to vector<256x128xf32>
    %32 = arith.addf %30, %31 : vector<256x128xf32>
    %cst_17 = arith.constant 0.000000e+00 : f32
    %33 = vector.broadcast %cst_17 : f32 to vector<256x128xf32>
    %34 = arith.cmpf ogt, %32, %33 : vector<256x128xf32>
    %35 = math.exp %32 : vector<256x128xf32>
    %cst_18 = arith.constant 1.000000e+00 : f32
    %36 = vector.broadcast %cst_18 : f32 to vector<256x128xf32>
    %37 = arith.subf %35, %36 : vector<256x128xf32>
    %38 = arith.select %34, %32, %37 : vector<256x128xi1>, vector<256x128xf32>
    %c480 = arith.constant 480 : index
    %c0_19 = arith.constant 0 : index
    %39 = vector.load %arg2[%c480, %c0_19] : memref<752x128xf32, #tpu.memory_space<vmem>>, vector<128x128xf32>
    %c608 = arith.constant 608 : index
    %c0_20 = arith.constant 0 : index
    %40 = vector.load %arg2[%c608, %c0_20] : memref<752x128xf32, #tpu.memory_space<vmem>>, vector<1x128xf32>
    %cst_21 = arith.constant dense<0.000000e+00> : vector<256x128xf32>
    %41 = tpu.matmul %38, %39, %cst_21 {dimension_numbers = #tpu.dot_dimension_numbers<[1], [0], [0], [1], [0, 0, 1, 1], [], []>} : vector<256x128xf32>, vector<128x128xf32>, vector<256x128xf32> -> vector<256x128xf32>
    %42 = vector.broadcast %40 : vector<1x128xf32> to vector<256x128xf32>
    %43 = arith.addf %41, %42 : vector<256x128xf32>
    %cst_22 = arith.constant 0.000000e+00 : f32
    %44 = vector.broadcast %cst_22 : f32 to vector<256x128xf32>
    %45 = arith.cmpf ogt, %43, %44 : vector<256x128xf32>
    %46 = math.exp %43 : vector<256x128xf32>
    %cst_23 = arith.constant 1.000000e+00 : f32
    %47 = vector.broadcast %cst_23 : f32 to vector<256x128xf32>
    %48 = arith.subf %46, %47 : vector<256x128xf32>
    %49 = arith.select %45, %43, %48 : vector<256x128xi1>, vector<256x128xf32>
    %c616 = arith.constant 616 : index
    %c0_24 = arith.constant 0 : index
    %50 = vector.load %arg2[%c616, %c0_24] : memref<752x128xf32, #tpu.memory_space<vmem>>, vector<128x128xf32>
    %c744 = arith.constant 744 : index
    %c0_25 = arith.constant 0 : index
    %51 = vector.load %arg2[%c744, %c0_25] : memref<752x128xf32, #tpu.memory_space<vmem>>, vector<1x128xf32>
    %cst_26 = arith.constant dense<0.000000e+00> : vector<256x128xf32>
    %52 = tpu.matmul %49, %50, %cst_26 {dimension_numbers = #tpu.dot_dimension_numbers<[1], [0], [0], [1], [0, 0, 1, 1], [], []>} : vector<256x128xf32>, vector<128x128xf32>, vector<256x128xf32> -> vector<256x128xf32>
    %53 = vector.broadcast %51 : vector<1x128xf32> to vector<256x128xf32>
    %54 = arith.addf %52, %53 : vector<256x128xf32>
    %55 = arith.addf %27, %54 : vector<256x128xf32>
    %c0_27 = arith.constant 0 : index
    %c0_28 = arith.constant 0 : index
    %56 = vector.load %arg3[%c0_27, %c0_28] : memref<256x128xf32, #tpu.memory_space<vmem>>, vector<256x128xf32>
    tpu.vector_store %arg3[%c0_27, %c0_28], %55 {strides = array<i32>} : memref<256x128xf32, #tpu.memory_space<vmem>>, vector<256x128xf32>,
    return
  }
  func.func @transform_0(%arg0: i32) -> (i32, i32) {
    %c0_i32 = arith.constant 0 : i32
    %c0_i32_0 = arith.constant 0 : i32
    return %arg0, %c0_i32 : i32, i32
  }
  func.func @transform_1(%arg0: i32) -> (i32, i32) {
    %c0_i32 = arith.constant 0 : i32
    %c0_i32_0 = arith.constant 0 : i32
    %c0_i32_1 = arith.constant 0 : i32
    return %c0_i32, %c0_i32_0 : i32, i32
  }
  func.func @transform_2(%arg0: i32) -> (i32, i32) {
    %c0_i32 = arith.constant 0 : i32
    %c0_i32_0 = arith.constant 0 : i32
    return %arg0, %c0_i32 : i32, i32
  }
}

</mosaic_0001>

<llo_original>
// kernel: fwd.1
$region0: #{fwd.1}
  #allocation0 [shape = 'u32[]', space=smem, size = 0x4, offset = 0x4, fixed_abs, tag = 'smem constant byte address 0x4 - core index']
  #allocation1 [shape = 'u32[144,128]{1,0:T(1,128)}', space=vmem, size = 0x12000, scoped, tag = 'internal scratch']
  %s0 = inlined_call_operand.vmem [shape: f32[512,64], index: 0, kind: input, shape index: {}]
  %s1 = inlined_call_operand.vmem [shape: f32[752,128], index: 1, kind: input, shape index: {}]
  %s2 = inlined_call_operand.vmem [shape: f32[512,128], index: 2, kind: output, shape index: {}]
  %s3 = sld [smem:[#allocation0]]
  $region41: #{fwd.1} parent=0
    _
  %s5 = ssub.s32 1, %s3
  %s6 = scalar_select 0, %s5, %s3
  loop: start=0, step=1, limit=4
  $region2: #{fwd.1} parent=0 // loop_pre_header
    _
  $region3: #{fwd.1} parent=0 // loop_header
    %s8 = sphi 0, %s12
    %p9 = scmp.ge.s32.totalorder %s8, 4
    %s18 = sphi 0, %s20
    %s21 = sphi 0, %s18
    %s22 = sphi 0, %s21
    %s38 = sphi 0, %s22
    %s42 = sphi 0, %s42
    %s44 = sphi 0, %s42
    %s45 = sphi 0, %s44
    %s59 = sphi 0, %s45
    %s65 = sphi 0, %s67
    %s68 = sphi 0, %s65
    %s69 = sphi 0, %s68
    %s85 = sphi 0, %s69
  $region4: #{fwd.1} parent=0 // loop_header_branch
    %11 = sbr.rel (%p9) target = $region8
  $region5: #{fwd.1} parent=0 // loop_body
    %s13 = ssub.s32 %s8, 1
    %s14 = ssub.s32 %s8, 2
    %s15 = sadd.s32 %s8, 1
    %s16 = ssub.s32 %s8, %s15
    %p17 = scmp.eq.s32.totalorder %s16, 0
    %s19 = sadd.s32 %s18, 1
    %s20 = scalar_select %p17, %s18, %s19
    %p23 = pneg %p17
    %p24 = scmp.eq.s32.totalorder %s8, 1
    %p25 = por %p23, %p24
    %p26 = scmp.ne.s32.totalorder %s18, %s21
    %p27 = scmp.eq.s32.totalorder %s8, 0
    %p28 = por %p26, %p27
    %p29 = scmp.ne.s32.totalorder %s18, %s21
    %p30 = scmp.eq.s32.totalorder %s13, 1
    %p31 = por %p29, %p30
    %p32 = scmp.ne.s32.totalorder %s21, %s22
    %p33 = scmp.eq.s32.totalorder %s13, 0
    %p34 = por %p32, %p33
    %p35 = scmp.ne.s32.totalorder %s21, %s22
    %p36 = scmp.eq.s32.totalorder %s14, 1
    %p37 = por %p35, %p36
    %p39 = scmp.ne.s32.totalorder %s22, %s38
    %p40 = scmp.eq.s32.totalorder %s14, 0
    %p41 = por %p39, %p40
    %s43 = sadd.s32 %s42, 1
    %p46 = scmp.eq.s32.totalorder %s8, 1
    %p47 = scmp.ne.s32.totalorder %s42, %s44
    %p48 = scmp.eq.s32.totalorder %s8, 0
    %p49 = por %p47, %p48
    %p50 = scmp.ne.s32.totalorder %s42, %s44
    %p51 = scmp.eq.s32.totalorder %s13, 1
    %p52 = por %p50, %p51
    %p53 = scmp.ne.s32.totalorder %s44, %s45
    %p54 = scmp.eq.s32.totalorder %s13, 0
    %p55 = por %p53, %p54
    %p56 = scmp.ne.s32.totalorder %s44, %s45
    %p57 = scmp.eq.s32.totalorder %s14, 1
    %p58 = por %p56, %p57
    %p60 = scmp.ne.s32.totalorder %s45, %s59
    %p61 = scmp.eq.s32.totalorder %s14, 0
    %p62 = por %p60, %p61
    %s63 = ssub.s32 %s8, %s15
    %p64 = scmp.eq.s32.totalorder %s63, 0
    %s66 = sadd.s32 %s65, 1
    %s67 = scalar_select %p64, %s65, %s66
    %p70 = pneg %p64
    %p71 = scmp.eq.s32.totalorder %s8, 1
    %p72 = por %p70, %p71
    %p73 = scmp.ne.s32.totalorder %s65, %s68
    %p74 = scmp.eq.s32.totalorder %s8, 0
    %p75 = por %p73, %p74
    %p76 = scmp.ne.s32.totalorder %s65, %s68
    %p77 = scmp.eq.s32.totalorder %s13, 1
    %p78 = por %p76, %p77
    %p79 = scmp.ne.s32.totalorder %s68, %s69
    %p80 = scmp.eq.s32.totalorder %s13, 0
    %p81 = por %p79, %p80
    %p82 = scmp.ne.s32.totalorder %s68, %s69
    %p83 = scmp.eq.s32.totalorder %s14, 1
    %p84 = por %p82, %p83
    %p86 = scmp.ne.s32.totalorder %s69, %s85
    %p87 = scmp.eq.s32.totalorder %s14, 0
    %p88 = por %p86, %p87
    %p89 = scmp.le.s32.totalorder 1, %s8
    %p90 = scmp.lt.s32.totalorder %s8, 3
    %p91 = pnand %p89, %p90
    %p92 = pneg %p91
    // Predicated region
    $region9: #{fwd.1} parent=5 // pred_check
      _
    $region10: #{fwd.1} parent=5 // pred_check_branch
      %94 = sbr.rel (%p91) target = $region12
    $region11: #{fwd.1} parent=5 // pred_region
      %s95 = ssub.s32 %s8, 1
      // Predicated region
      $region13: #{fwd.1} parent=11 // pred_check
        %p96 = pneg %p55
      $region14: #{fwd.1} parent=11 // pred_check_branch
        %98 = sbr.rel (%p96) target = $region16
      $region15: #{fwd.1} parent=11 // pred_region
        _
      $region16: #{fwd.1} parent=11 // pred_fallthru
        _
    $region12: #{fwd.1} parent=5 // pred_fallthru
      _
    %p99 = scmp.lt.s32.totalorder %s8, 2
    // Predicated region
    $region17: #{fwd.1} parent=5 // pred_check
      %p100 = pneg %p99
    $region18: #{fwd.1} parent=5 // pred_check_branch
      %102 = sbr.rel (%p100) target = $region20
    $region19: #{fwd.1} parent=5 // pred_region
      // Predicated region
      $region21: #{fwd.1} parent=19 // pred_check
        %p103 = pneg %p28
      $region22: #{fwd.1} parent=19 // pred_check_branch
        %105 = sbr.rel (%p103) target = $region24
      $region23: #{fwd.1} parent=19 // pred_region
        %s106 = smul.u32 32, %s8
        %p107 = scmp.lt.s32.totalorder %s106, 63
        %s108 = scalar_select %p107, %s106, 63
        %s109 = smul.addr %s108, 8
        %s110 = scalar_lea.vmem %s0, %s109
        %s111 = smul.u32 32, %s8
      $region24: #{fwd.1} parent=19 // pred_fallthru
        _
    $region20: #{fwd.1} parent=5 // pred_fallthru
      _
    %p112 = scmp.le.s32.totalorder 1, %s8
    %p113 = scmp.lt.s32.totalorder %s8, 3
    %p114 = pnand %p112, %p113
    %p115 = pneg %p114
    // Predicated region
    $region25: #{fwd.1} parent=5 // pred_check
      _
    $region26: #{fwd.1} parent=5 // pred_check_branch
      %117 = sbr.rel (%p114) target = $region28
    $region27: #{fwd.1} parent=5 // pred_region
      %s118 = ssub.s32 %s8, 1
      %s119 = smul.u32 32, %s13
      %p120 = scmp.lt.s32.totalorder %s119, 63
      %s121 = scalar_select %p120, %s119, 63
      %s122 = smul.addr %s121, 8
      %s123 = scalar_lea.vmem %s0, %s122
      %p124 = pneg %p34
      %p125 = pneg %p31
      %p126 = pneg %p55
      %p127 = pneg %p52
      %p128 = pneg %p81
      %p129 = pneg %p78
      %s130 = smul.u32 32, %s13
      %p131 = scmp.lt.s32.totalorder %s130, 63
      %s132 = scalar_select %p131, %s130, 63
      %s133 = smul.addr %s132, 8
      %s134 = scalar_lea.vmem %s2, %s133
      %s135 = smul.u32 32, %s13
      %p136 = scmp.lt.s32.totalorder %s135, 63
      %s137 = scalar_select %p136, %s135, 63
      %s138 = smul.addr %s137, 8
      %s139 = scalar_lea.vmem %s0, %s138
      %s140 = smul.u32 32, %s13
      %s141 = smul.u32 32, %s13
      %p142 = scmp.lt.s32.totalorder %s141, 63
      %s143 = scalar_select %p142, %s141, 63
      %s144 = smul.addr %s143, 8
      %s145 = scalar_lea.vmem %s2, %s144
      %s146 = smul.u32 32, %s13
      %v147 = vld [vmem:[%s139] sm:$0xff]
      %v148 = vld [vmem:[%s139 + $0x8] sm:$0xff]
      %v149 = vld [vmem:[%s139 + $0x10] sm:$0xff]
      %v150 = vld [vmem:[%s139 + $0x18] sm:$0xff]
      %v151 = vld [vmem:[%s139 + $0x20] sm:$0xff]
      %v152 = vld [vmem:[%s139 + $0x28] sm:$0xff]
      %v153 = vld [vmem:[%s139 + $0x30] sm:$0xff]
      %v154 = vld [vmem:[%s139 + $0x38] sm:$0xff]
      %v155 = vld [vmem:[%s139 + $0x40] sm:$0xff]
      %v156 = vld [vmem:[%s139 + $0x48] sm:$0xff]
      %v157 = vld [vmem:[%s139 + $0x50] sm:$0xff]
      %v158 = vld [vmem:[%s139 + $0x58] sm:$0xff]
      %v159 = vld [vmem:[%s139 + $0x60] sm:$0xff]
      %v160 = vld [vmem:[%s139 + $0x68] sm:$0xff]
      %v161 = vld [vmem:[%s139 + $0x70] sm:$0xff]
      %v162 = vld [vmem:[%s139 + $0x78] sm:$0xff]
      %v163 = vld [vmem:[%s139 + $0x80] sm:$0xff]
      %v164 = vld [vmem:[%s139 + $0x88] sm:$0xff]
      %v165 = vld [vmem:[%s139 + $0x90] sm:$0xff]
      %v166 = vld [vmem:[%s139 + $0x98] sm:$0xff]
      %v167 = vld [vmem:[%s139 + $0xa0] sm:$0xff]
      %v168 = vld [vmem:[%s139 + $0xa8] sm:$0xff]
      %v169 = vld [vmem:[%s139 + $0xb0] sm:$0xff]
      %v170 = vld [vmem:[%s139 + $0xb8] sm:$0xff]
      %v171 = vld [vmem:[%s139 + $0xc0] sm:$0xff]
      %v172 = vld [vmem:[%s139 + $0xc8] sm:$0xff]
      %v173 = vld [vmem:[%s139 + $0xd0] sm:$0xff]
      %v174 = vld [vmem:[%s139 + $0xd8] sm:$0xff]
      %v175 = vld [vmem:[%s139 + $0xe0] sm:$0xff]
      %v176 = vld [vmem:[%s139 + $0xe8] sm:$0xff]
      %v177 = vld [vmem:[%s139 + $0xf0] sm:$0xff]
      %v178 = vld [vmem:[%s139 + $0xf8] sm:$0xff]
      %v179 = vld [vmem:[%s1] sm:$0xff]
      %v180 = vld [vmem:[%s1 + $0x8] sm:$0xff]
      %v181 = vld [vmem:[%s1 + $0x10] sm:$0xff]
      %v182 = vld [vmem:[%s1 + $0x18] sm:$0xff]
      %v183 = vld [vmem:[%s1 + $0x20] sm:$0xff]
      %v184 = vld [vmem:[%s1 + $0x28] sm:$0xff]
      %v185 = vld [vmem:[%s1 + $0x30] sm:$0xff]
      %v186 = vld [vmem:[%s1 + $0x38] sm:$0xff]
      %v187 = vld [vmem:[%s1 + $0x40] sm:$0x1]
      %v188 = vlaneseq
      %v189 = vshrl.u32 %v188, 7
      %v190 = vsub.s32 0, %v189
      %v191 = vrot.slane %v187, %v190
      %vm192 = vcmask 523264
      %v194 = vsel %vm192, %v147, 0
      %v197 = vsel %vm192, %v148, 0
      %v200 = vsel %vm192, %v149, 0
      %v203 = vsel %vm192, %v150, 0
      %v206 = vsel %vm192, %v151, 0
      %v209 = vsel %vm192, %v152, 0
      %v212 = vsel %vm192, %v153, 0
      %v215 = vsel %vm192, %v154, 0
      %v218 = vsel %vm192, %v155, 0
      %v221 = vsel %vm192, %v156, 0
      %v224 = vsel %vm192, %v157, 0
      %v227 = vsel %vm192, %v158, 0
      %v230 = vsel %vm192, %v159, 0
      %v233 = vsel %vm192, %v160, 0
      %v236 = vsel %vm192, %v161, 0
      %v239 = vsel %vm192, %v162, 0
      %v242 = vsel %vm192, %v163, 0
      %v245 = vsel %vm192, %v164, 0
      %v248 = vsel %vm192, %v165, 0
      %v251 = vsel %vm192, %v166, 0
      %v254 = vsel %vm192, %v167, 0
      %v257 = vsel %vm192, %v168, 0
      %v260 = vsel %vm192, %v169, 0
      %v263 = vsel %vm192, %v170, 0
      %v266 = vsel %vm192, %v171, 0
      %v269 = vsel %vm192, %v172, 0
      %v272 = vsel %vm192, %v173, 0
      %v275 = vsel %vm192, %v174, 0
      %v278 = vsel %vm192, %v175, 0
      %v281 = vsel %vm192, %v176, 0
      %v284 = vsel %vm192, %v177, 0
      %v287 = vsel %vm192, %v178, 0
      %289 = vmatprep.subr.mxu0 0.0
      %290 = vmatpush1.msra.mxu0 %v179
      %291 = vmatprep.subr.mxu0 0.0
      %292 = vmatpush1.msra.mxu0 %v180
      %293 = vmatprep.subr.mxu0 0.0
      %294 = vmatpush1.msra.mxu0 %v181
      %295 = vmatprep.subr.mxu0 0.0
      %296 = vmatpush1.msra.mxu0 %v182
      %297 = vmatprep.subr.mxu0 0.0
      %298 = vmatpush1.msra.mxu0 %v183
      %299 = vmatprep.subr.mxu0 0.0
      %300 = vmatpush1.msra.mxu0 %v184
      %301 = vmatprep.subr.mxu0 0.0
      %302 = vmatpush1.msra.mxu0 %v185
      %303 = vmatprep.subr.mxu0 0.0
      %304 = vmatpush1.msra.mxu0 %v186
      %305 = vmatprep.subr.mxu0 0.0
      %306 = vmatpush1.msra.mxu0 0.0
      %307 = vmatprep.subr.mxu0 0.0
      %308 = vmatpush1.msra.mxu0 0.0
      %309 = vmatprep.subr.mxu0 0.0
      %310 = vmatpush1.msra.mxu0 0.0
      %311 = vmatprep.subr.mxu0 0.0
      %312 = vmatpush1.msra.mxu0 0.0
      %313 = vmatprep.subr.mxu0 0.0
      %314 = vmatpush1.msra.mxu0 0.0
      %315 = vmatprep.subr.mxu0 0.0
      %316 = vmatpush1.msra.mxu0 0.0
      %317 = vmatprep.subr.mxu0 0.0
      %318 = vmatpush1.msra.mxu0 0.0
      %319 = vmatprep.subr.mxu0 0.0
      %320 = vmatpush1.msra.mxu0 0.0
      %321 = vmatprep.subr.mxu0 0.0
      %322 = vmatpush1.msra.mxu0 0.0
      %323 = vmatprep.subr.mxu0 0.0
      %324 = vmatpush1.msra.mxu0 0.0
      %325 = vmatprep.subr.mxu0 0.0
      %326 = vmatpush1.msra.mxu0 0.0
      %327 = vmatprep.subr.mxu0 0.0
      %328 = vmatpush1.msra.mxu0 0.0
      %329 = vmatprep.subr.mxu0 0.0
      %330 = vmatpush1.msra.mxu0 0.0
      %331 = vmatprep.subr.mxu0 0.0
      %332 = vmatpush1.msra.mxu0 0.0
      %333 = vmatprep.subr.mxu0 0.0
      %334 = vmatpush1.msra.mxu0 0.0
      %335 = vmatprep.subr.mxu0 0.0
      %336 = vmatpush1.msra.mxu0 0.0
      %337 = vmatprep.subr.mxu0 0.0
      %338 = vmatpush1.msra.mxu0 0.0
      %339 = vmatprep.subr.mxu0 0.0
      %340 = vmatpush1.msra.mxu0 0.0
      %341 = vmatprep.subr.mxu0 0.0
      %342 = vmatpush1.msra.mxu0 0.0
      %343 = vmatprep.subr.mxu0 0.0
      %344 = vmatpush1.msra.mxu0 0.0
      %345 = vmatprep.subr.mxu0 0.0
      %346 = vmatpush1.msra.mxu0 0.0
      %347 = vmatprep.subr.mxu0 0.0
      %348 = vmatpush1.msra.mxu0 0.0
      %349 = vmatprep.subr.mxu0 0.0
      %350 = vmatpush1.msra.mxu0 0.0
      %351 = vmatprep.subr.mxu0 0.0
      %352 = vmatpush1.msra.mxu0 0.0
      %353 = vmatprep.mubr.f32.mxu0 0.0
      %354 = vmatmul.mubr.f32.gmra.mrb[0].mxu0 %v194
      %v355 = vpop.f32.mrb[0].mxu0
      %v356 = vadd.f32 %v191, %v355
      %v357 = vpop.f32.mrb[0].mxu0
      %358 = vmatprep.mubr.f32.mxu0 0.0
      %359 = vmatmul.mubr.f32.gmra.mrb[0].mxu0 %v197
      %v360 = vpop.f32.mrb[0].mxu0
      %v361 = vadd.f32 %v191, %v360
      %v362 = vpop.f32.mrb[0].mxu0
      %363 = vmatprep.mubr.f32.mxu0 0.0
      %364 = vmatmul.mubr.f32.gmra.mrb[0].mxu0 %v200
      %v365 = vpop.f32.mrb[0].mxu0
      %v366 = vadd.f32 %v191, %v365
      %v367 = vpop.f32.mrb[0].mxu0
      %368 = vmatprep.mubr.f32.mxu0 0.0
      %369 = vmatmul.mubr.f32.gmra.mrb[0].mxu0 %v203
      %v370 = vpop.f32.mrb[0].mxu0
      %v371 = vadd.f32 %v191, %v370
      %v372 = vpop.f32.mrb[0].mxu0
      %373 = vmatprep.mubr.f32.mxu0 0.0
      %374 = vmatmul.mubr.f32.gmra.mrb[0].mxu0 %v206
      %v375 = vpop.f32.mrb[0].mxu0
      %v376 = vadd.f32 %v191, %v375
      %v377 = vpop.f32.mrb[0].mxu0
      %378 = vmatprep.mubr.f32.mxu0 0.0
      %379 = vmatmul.mubr.f32.gmra.mrb[0].mxu0 %v209
      %v380 = vpop.f32.mrb[0].mxu0
      %v381 = vadd.f32 %v191, %v380
      %v382 = vpop.f32.mrb[0].mxu0
      %383 = vmatprep.mubr.f32.mxu0 0.0
      %384 = vmatmul.mubr.f32.gmra.mrb[0].mxu0 %v212
      %v385 = vpop.f32.mrb[0].mxu0
      %v386 = vadd.f32 %v191, %v385
      %v387 = vpop.f32.mrb[0].mxu0
      %388 = vmatprep.mubr.f32.mxu0 0.0
      %389 = vmatmul.mubr.f32.gmra.mrb[0].mxu0 %v215
      %v390 = vpop.f32.mrb[0].mxu0
      %v391 = vadd.f32 %v191, %v390
      %v392 = vpop.f32.mrb[0].mxu0
      %393 = vmatprep.mubr.f32.mxu0 0.0
      %394 = vmatmul.mubr.f32.gmra.mrb[0].mxu0 %v218
      %v395 = vpop.f32.mrb[0].mxu0
      %v396 = vadd.f32 %v191, %v395
      %v397 = vpop.f32.mrb[0].mxu0
      %398 = vmatprep.mubr.f32.mxu0 0.0
      %399 = vmatmul.mubr.f32.gmra.mrb[0].mxu0 %v221
      %v400 = vpop.f32.mrb[0].mxu0
      %v401 = vadd.f32 %v191, %v400
      %v402 = vpop.f32.mrb[0].mxu0
      %403 = vmatprep.mubr.f32.mxu0 0.0
      %404 = vmatmul.mubr.f32.gmra.mrb[0].mxu0 %v224
      %v405 = vpop.f32.mrb[0].mxu0
      %v406 = vadd.f32 %v191, %v405
      %v407 = vpop.f32.mrb[0].mxu0
      %408 = vmatprep.mubr.f32.mxu0 0.0
      %409 = vmatmul.mubr.f32.gmra.mrb[0].mxu0 %v227
      %v410 = vpop.f32.mrb[0].mxu0
      %v411 = vadd.f32 %v191, %v410
      %v412 = vpop.f32.mrb[0].mxu0
      %413 = vmatprep.mubr.f32.mxu0 0.0
      %414 = vmatmul.mubr.f32.gmra.mrb[0].mxu0 %v230
      %v415 = vpop.f32.mrb[0].mxu0
      %v416 = vadd.f32 %v191, %v415
      %v417 = vpop.f32.mrb[0].mxu0
      %418 = vmatprep.mubr.f32.mxu0 0.0
      %419 = vmatmul.mubr.f32.gmra.mrb[0].mxu0 %v233
      %v420 = vpop.f32.mrb[0].mxu0
      %v421 = vadd.f32 %v191, %v420
      %v422 = vpop.f32.mrb[0].mxu0
      %423 = vmatprep.mubr.f32.mxu0 0.0
      %424 = vmatmul.mubr.f32.gmra.mrb[0].mxu0 %v236
      %v425 = vpop.f32.mrb[0].mxu0
      %v426 = vadd.f32 %v191, %v425
      %v427 = vpop.f32.mrb[0].mxu0
      %428 = vmatprep.mubr.f32.mxu0 0.0
      %429 = vmatmul.mubr.f32.gmra.mrb[0].mxu0 %v239
      %v430 = vpop.f32.mrb[0].mxu0
      %v431 = vadd.f32 %v191, %v430
      %v432 = vpop.f32.mrb[0].mxu0
      %433 = vmatprep.mubr.f32.mxu0 0.0
      %434 = vmatmul.mubr.f32.gmra.mrb[0].mxu0 %v242
      %v435 = vpop.f32.mrb[0].mxu0
      %v436 = vadd.f32 %v191, %v435
      %v437 = vpop.f32.mrb[0].mxu0
      %438 = vmatprep.mubr.f32.mxu0 0.0
      %439 = vmatmul.mubr.f32.gmra.mrb[0].mxu0 %v245
      %v440 = vpop.f32.mrb[0].mxu0
      %v441 = vadd.f32 %v191, %v440
      %v442 = vpop.f32.mrb[0].mxu0
      %443 = vmatprep.mubr.f32.mxu0 0.0
      %444 = vmatmul.mubr.f32.gmra.mrb[0].mxu0 %v248
      %v445 = vpop.f32.mrb[0].mxu0
      %v446 = vadd.f32 %v191, %v445
      %v447 = vpop.f32.mrb[0].mxu0
      %448 = vmatprep.mubr.f32.mxu0 0.0
      %449 = vmatmul.mubr.f32.gmra.mrb[0].mxu0 %v251
      %v450 = vpop.f32.mrb[0].mxu0
      %v451 = vadd.f32 %v191, %v450
      %v452 = vpop.f32.mrb[0].mxu0
      %453 = vmatprep.mubr.f32.mxu0 0.0
      %454 = vmatmul.mubr.f32.gmra.mrb[0].mxu0 %v254
      %v455 = vpop.f32.mrb[0].mxu0
      %v456 = vadd.f32 %v191, %v455
      %v457 = vpop.f32.mrb[0].mxu0
      %458 = vmatprep.mubr.f32.mxu0 0.0
      %459 = vmatmul.mubr.f32.gmra.mrb[0].mxu0 %v257
      %v460 = vpop.f32.mrb[0].mxu0
      %v461 = vadd.f32 %v191, %v460
      %v462 = vpop.f32.mrb[0].mxu0
      %463 = vmatprep.mubr.f32.mxu0 0.0
      %464 = vmatmul.mubr.f32.gmra.mrb[0].mxu0 %v260
      %v465 = vpop.f32.mrb[0].mxu0
      %v466 = vadd.f32 %v191, %v465
      %v467 = vpop.f32.mrb[0].mxu0
      %468 = vmatprep.mubr.f32.mxu0 0.0
      %469 = vmatmul.mubr.f32.gmra.mrb[0].mxu0 %v263
      %v470 = vpop.f32.mrb[0].mxu0
      %v471 = vadd.f32 %v191, %v470
      %v472 = vpop.f32.mrb[0].mxu0
      %473 = vmatprep.mubr.f32.mxu0 0.0
      %474 = vmatmul.mubr.f32.gmra.mrb[0].mxu0 %v266
      %v475 = vpop.f32.mrb[0].mxu0
      %v476 = vadd.f32 %v191, %v475
      %v477 = vpop.f32.mrb[0].mxu0
      %478 = vmatprep.mubr.f32.mxu0 0.0
      %479 = vmatmul.mubr.f32.gmra.mrb[0].mxu0 %v269
      %v480 = vpop.f32.mrb[0].mxu0
      %v481 = vadd.f32 %v191, %v480
      %v482 = vpop.f32.mrb[0].mxu0
      %483 = vmatprep.mubr.f32.mxu0 0.0
      %484 = vmatmul.mubr.f32.gmra.mrb[0].mxu0 %v272
      %v485 = vpop.f32.mrb[0].mxu0
      %v486 = vadd.f32 %v191, %v485
      %v487 = vpop.f32.mrb[0].mxu0
      %488 = vmatprep.mubr.f32.mxu0 0.0
      %489 = vmatmul.mubr.f32.gmra.mrb[0].mxu0 %v275
      %v490 = vpop.f32.mrb[0].mxu0
      %v491 = vadd.f32 %v191, %v490
      %v492 = vpop.f32.mrb[0].mxu0
      %493 = vmatprep.mubr.f32.mxu0 0.0
      %494 = vmatmul.mubr.f32.gmra.mrb[0].mxu0 %v278
      %v495 = vpop.f32.mrb[0].mxu0
      %v496 = vadd.f32 %v191, %v495
      %v497 = vpop.f32.mrb[0].mxu0
      %498 = vmatprep.mubr.f32.mxu0 0.0
      %499 = vmatmul.mubr.f32.gmra.mrb[0].mxu0 %v281
      %v500 = vpop.f32.mrb[0].mxu0
      %v501 = vadd.f32 %v191, %v500
      %v502 = vpop.f32.mrb[0].mxu0
      %503 = vmatprep.mubr.f32.mxu0 0.0
      %504 = vmatmul.mubr.f32.gmra.mrb[0].mxu0 %v284
      %v505 = vpop.f32.mrb[0].mxu0
      %v506 = vadd.f32 %v191, %v505
      %v507 = vpop.f32.mrb[0].mxu0
      %508 = vmatprep.mubr.f32.mxu0 0.0
      %509 = vmatmul.mubr.f32.gmra.mrb[0].mxu0 %v287
      %v510 = vpop.f32.mrb[0].mxu0
      %v511 = vadd.f32 %v191, %v510
      %v512 = vpop.f32.mrb[0].mxu0
      %513 = vdwg.mxu0
      %vm514 = vcmp.gt.f32.partialorder %v356, 0.0
      %vm515 = vcmp.gt.f32.partialorder %v361, 0.0
      %vm516 = vcmp.gt.f32.partialorder %v366, 0.0
      %vm517 = vcmp.gt.f32.partialorder %v371, 0.0
      %vm518 = vcmp.gt.f32.partialorder %v376, 0.0
      %vm519 = vcmp.gt.f32.partialorder %v381, 0.0
      %vm520 = vcmp.gt.f32.partialorder %v386, 0.0
      %vm521 = vcmp.gt.f32.partialorder %v391, 0.0
      %vm522 = vcmp.gt.f32.partialorder %v396, 0.0
      %vm523 = vcmp.gt.f32.partialorder %v401, 0.0
      %vm524 = vcmp.gt.f32.partialorder %v406, 0.0
      %vm525 = vcmp.gt.f32.partialorder %v411, 0.0
      %vm526 = vcmp.gt.f32.partialorder %v416, 0.0
      %vm527 = vcmp.gt.f32.partialorder %v421, 0.0
      %vm528 = vcmp.gt.f32.partialorder %v426, 0.0
      %vm529 = vcmp.gt.f32.partialorder %v431, 0.0
      %vm530 = vcmp.gt.f32.partialorder %v436, 0.0
      %vm531 = vcmp.gt.f32.partialorder %v441, 0.0
      %vm532 = vcmp.gt.f32.partialorder %v446, 0.0
      %vm533 = vcmp.gt.f32.partialorder %v451, 0.0
      %vm534 = vcmp.gt.f32.partialorder %v456, 0.0
      %vm535 = vcmp.gt.f32.partialorder %v461, 0.0
      %vm536 = vcmp.gt.f32.partialorder %v466, 0.0
      %vm537 = vcmp.gt.f32.partialorder %v471, 0.0
      %vm538 = vcmp.gt.f32.partialorder %v476, 0.0
      %vm539 = vcmp.gt.f32.partialorder %v481, 0.0
      %vm540 = vcmp.gt.f32.partialorder %v486, 0.0
      %vm541 = vcmp.gt.f32.partialorder %v491, 0.0
      %vm542 = vcmp.gt.f32.partialorder %v496, 0.0
      %vm543 = vcmp.gt.f32.partialorder %v501, 0.0
      %vm544 = vcmp.gt.f32.partialorder %v506, 0.0
      %vm545 = vcmp.gt.f32.partialorder %v511, 0.0
      %v546 = vmul.f32 %v356, 1.442695
      %v547 = vpow.pop %v546
      %v548 = vmul.f32 %v361, 1.442695
      %v549 = vpow.pop %v548
      %v550 = vmul.f32 %v366, 1.442695
      %v551 = vpow.pop %v550
      %v552 = vmul.f32 %v371, 1.442695
      %v553 = vpow.pop %v552
      %v554 = vmul.f32 %v376, 1.442695
      %v555 = vpow.pop %v554
      %v556 = vmul.f32 %v381, 1.442695
      %v557 = vpow.pop %v556
      %v558 = vmul.f32 %v386, 1.442695
      %v559 = vpow.pop %v558
      %v560 = vmul.f32 %v391, 1.442695
      %v561 = vpow.pop %v560
      %v562 = vmul.f32 %v396, 1.442695
      %v563 = vpow.pop %v562
      %v564 = vmul.f32 %v401, 1.442695
      %v565 = vpow.pop %v564
      %v566 = vmul.f32 %v406, 1.442695
      %v567 = vpow.pop %v566
      %v568 = vmul.f32 %v411, 1.442695
      %v569 = vpow.pop %v568
      %v570 = vmul.f32 %v416, 1.442695
      %v571 = vpow.pop %v570
      %v572 = vmul.f32 %v421, 1.442695
      %v573 = vpow.pop %v572
      %v574 = vmul.f32 %v426, 1.442695
      %v575 = vpow.pop %v574
      %v576 = vmul.f32 %v431, 1.442695
      %v577 = vpow.pop %v576
      %v578 = vmul.f32 %v436, 1.442695
      %v579 = vpow.pop %v578
      %v580 = vmul.f32 %v441, 1.442695
      %v581 = vpow.pop %v580
      %v582 = vmul.f32 %v446, 1.442695
      %v583 = vpow.pop %v582
      %v584 = vmul.f32 %v451, 1.442695
      %v585 = vpow.pop %v584
      %v586 = vmul.f32 %v456, 1.442695
      %v587 = vpow.pop %v586
      %v588 = vmul.f32 %v461, 1.442695
      %v589 = vpow.pop %v588
      %v590 = vmul.f32 %v466, 1.442695
      %v591 = vpow.pop %v590
      %v592 = vmul.f32 %v471, 1.442695
      %v593 = vpow.pop %v592
      %v594 = vmul.f32 %v476, 1.442695
      %v595 = vpow.pop %v594
      %v596 = vmul.f32 %v481, 1.442695
      %v597 = vpow.pop %v596
      %v598 = vmul.f32 %v486, 1.442695
      %v599 = vpow.pop %v598
      %v600 = vmul.f32 %v491, 1.442695
      %v601 = vpow.pop %v600
      %v602 = vmul.f32 %v496, 1.442695
      %v603 = vpow.pop %v602
      %v604 = vmul.f32 %v501, 1.442695
      %v605 = vpow.pop %v604
      %v606 = vmul.f32 %v506, 1.442695
      %v607 = vpow.pop %v606
      %v608 = vmul.f32 %v511, 1.442695
      %v609 = vpow.pop %v608
      %v610 = vsub.f32 %v547, 1.0
      %v611 = vsub.f32 %v549, 1.0
      %v612 = vsub.f32 %v551, 1.0
      %v613 = vsub.f32 %v553, 1.0
      %v614 = vsub.f32 %v555, 1.0
      %v615 = vsub.f32 %v557, 1.0
      %v616 = vsub.f32 %v559, 1.0
      %v617 = vsub.f32 %v561, 1.0
      %v618 = vsub.f32 %v563, 1.0
      %v619 = vsub.f32 %v565, 1.0
      %v620 = vsub.f32 %v567, 1.0
      %v621 = vsub.f32 %v569, 1.0
      %v622 = vsub.f32 %v571, 1.0
      %v623 = vsub.f32 %v573, 1.0
      %v624 = vsub.f32 %v575, 1.0
      %v625 = vsub.f32 %v577, 1.0
      %v626 = vsub.f32 %v579, 1.0
      %v627 = vsub.f32 %v581, 1.0
      %v628 = vsub.f32 %v583, 1.0
      %v629 = vsub.f32 %v585, 1.0
      %v630 = vsub.f32 %v587, 1.0
      %v631 = vsub.f32 %v589, 1.0
      %v632 = vsub.f32 %v591, 1.0
      %v633 = vsub.f32 %v593, 1.0
      %v634 = vsub.f32 %v595, 1.0
      %v635 = vsub.f32 %v597, 1.0
      %v636 = vsub.f32 %v599, 1.0
      %v637 = vsub.f32 %v601, 1.0
      %v638 = vsub.f32 %v603, 1.0
      %v639 = vsub.f32 %v605, 1.0
      %v640 = vsub.f32 %v607, 1.0
      %v641 = vsub.f32 %v609, 1.0
      %v642 = vsel %vm514, %v356, %v610
      %v643 = vsel %vm515, %v361, %v611
      %v644 = vsel %vm516, %v366, %v612
      %v645 = vsel %vm517, %v371, %v613
      %v646 = vsel %vm518, %v376, %v614
      %v647 = vsel %vm519, %v381, %v615
      %v648 = vsel %vm520, %v386, %v616
      %v649 = vsel %vm521, %v391, %v617
      %v650 = vsel %vm522, %v396, %v618
      %v651 = vsel %vm523, %v401, %v619
      %v652 = vsel %vm524, %v406, %v620
      %v653 = vsel %vm525, %v411, %v621
      %v654 = vsel %vm526, %v416, %v622
      %v655 = vsel %vm527, %v421, %v623
      %v656 = vsel %vm528, %v426, %v624
      %v657 = vsel %vm529, %v431, %v625
      %v658 = vsel %vm530, %v436, %v626
      %v659 = vsel %vm531, %v441, %v627
      %v660 = vsel %vm532, %v446, %v628
      %v661 = vsel %vm533, %v451, %v629
      %v662 = vsel %vm534, %v456, %v630
      %v663 = vsel %vm535, %v461, %v631
      %v664 = vsel %vm536, %v466, %v632
      %v665 = vsel %vm537, %v471, %v633
      %v666 = vsel %vm538, %v476, %v634
      %v667 = vsel %vm539, %v481, %v635
      %v668 = vsel %vm540, %v486, %v636
      %v669 = vsel %vm541, %v491, %v637
      %v670 = vsel %vm542, %v496, %v638
      %v671 = vsel %vm543, %v501, %v639
      %v672 = vsel %vm544, %v506, %v640
      %v673 = vsel %vm545, %v511, %v641
      %v674 = vld [vmem:[%s1 + $0x48] sm:$0xff]
      %v675 = vld [vmem:[%s1 + $0x50] sm:$0xff]
      %v676 = vld [vmem:[%s1 + $0x58] sm:$0xff]
      %v677 = vld [vmem:[%s1 + $0x60] sm:$0xff]
      %v678 = vld [vmem:[%s1 + $0x68] sm:$0xff]
      %v679 = vld [vmem:[%s1 + $0x70] sm:$0xff]
      %v680 = vld [vmem:[%s1 + $0x78] sm:$0xff]
      %v681 = vld [vmem:[%s1 + $0x80] sm:$0xff]
      %v682 = vld [vmem:[%s1 + $0x88] sm:$0xff]
      %v683 = vld [vmem:[%s1 + $0x90] sm:$0xff]
      %v684 = vld [vmem:[%s1 + $0x98] sm:$0xff]
      %v685 = vld [vmem:[%s1 + $0xa0] sm:$0xff]
      %v686 = vld [vmem:[%s1 + $0xa8] sm:$0xff]
      %v687 = vld [vmem:[%s1 + $0xb0] sm:$0xff]
      %v688 = vld [vmem:[%s1 + $0xb8] sm:$0xff]
      %v689 = vld [vmem:[%s1 + $0xc0] sm:$0xff]
      %v690 = vld [vmem:[%s1 + $0xc8] sm:$0x1]
      %v691 = vlaneseq
      %v692 = vshrl.u32 %v691, 7
      %v693 = vsub.s32 0, %v692
      %v694 = vrot.slane %v690, %v693
      %695 = vmatprep.subr.mxu0 0.0
      %696 = vmatpush1.msra.mxu0 %v674
      %697 = vmatprep.subr.mxu0 0.0
      %698 = vmatpush1.msra.mxu0 %v675
      %699 = vmatprep.subr.mxu0 0.0
      %700 = vmatpush1.msra.mxu0 %v676
      %701 = vmatprep.subr.mxu0 0.0
      %702 = vmatpush1.msra.mxu0 %v677
      %703 = vmatprep.subr.mxu0 0.0
      %704 = vmatpush1.msra.mxu0 %v678
      %705 = vmatprep.subr.mxu0 0.0
      %706 = vmatpush1.msra.mxu0 %v679
      %707 = vmatprep.subr.mxu0 0.0
      %708 = vmatpush1.msra.mxu0 %v680
      %709 = vmatprep.subr.mxu0 0.0
      %710 = vmatpush1.msra.mxu0 %v681
      %711 = vmatprep.subr.mxu0 0.0
      %712 = vmatpush1.msra.mxu0 %v682
      %713 = vmatprep.subr.mxu0 0.0
      %714 = vmatpush1.msra.mxu0 %v683
      %715 = vmatprep.subr.mxu0 0.0
      %716 = vmatpush1.msra.mxu0 %v684
      %717 = vmatprep.subr.mxu0 0.0
      %718 = vmatpush1.msra.mxu0 %v685
      %719 = vmatprep.subr.mxu0 0.0
      %720 = vmatpush1.msra.mxu0 %v686
      %721 = vmatprep.subr.mxu0 0.0
      %722 = vmatpush1.msra.mxu0 %v687
      %723 = vmatprep.subr.mxu0 0.0
      %724 = vmatpush1.msra.mxu0 %v688
      %725 = vmatprep.subr.mxu0 0.0
      %726 = vmatpush1.msra.mxu0 %v689
      %727 = vmatprep.subr.mxu0 0.0
      %728 = vmatpush1.msra.mxu0 0.0
      %729 = vmatprep.subr.mxu0 0.0
      %730 = vmatpush1.msra.mxu0 0.0
      %731 = vmatprep.subr.mxu0 0.0
      %732 = vmatpush1.msra.mxu0 0.0
      %733 = vmatprep.subr.mxu0 0.0
      %734 = vmatpush1.msra.mxu0 0.0
      %735 = vmatprep.subr.mxu0 0.0
      %736 = vmatpush1.msra.mxu0 0.0
      %737 = vmatprep.subr.mxu0 0.0
      %738 = vmatpush1.msra.mxu0 0.0
      %739 = vmatprep.subr.mxu0 0.0
      %740 = vmatpush1.msra.mxu0 0.0
      %741 = vmatprep.subr.mxu0 0.0
      %742 = vmatpush1.msra.mxu0 0.0
      %743 = vmatprep.subr.mxu0 0.0
      %744 = vmatpush1.msra.mxu0 0.0
      %745 = vmatprep.subr.mxu0 0.0
      %746 = vmatpush1.msra.mxu0 0.0
      %747 = vmatprep.subr.mxu0 0.0
      %748 = vmatpush1.msra.mxu0 0.0
      %749 = vmatprep.subr.mxu0 0.0
      %750 = vmatpush1.msra.mxu0 0.0
      %751 = vmatprep.subr.mxu0 0.0
      %752 = vmatpush1.msra.mxu0 0.0
      %753 = vmatprep.subr.mxu0 0.0
      %754 = vmatpush1.msra.mxu0 0.0
      %755 = vmatprep.subr.mxu0 0.0
      %756 = vmatpush1.msra.mxu0 0.0
      %757 = vmatprep.subr.mxu0 0.0
      %758 = vmatpush1.msra.mxu0 0.0
      %759 = vmatprep.mubr.f32.mxu0 0.0
      %760 = vmatmul.mubr.f32.gmra.mrb[0].mxu0 %v642
      %v761 = vpop.f32.mrb[0].mxu0
      %v762 = vadd.f32 %v694, %v761
      %v763 = vpop.f32.mrb[0].mxu0
      %764 = vmatprep.mubr.f32.mxu0 0.0
      %765 = vmatmul.mubr.f32.gmra.mrb[0].mxu0 %v643
      %v766 = vpop.f32.mrb[0].mxu0
      %v767 = vadd.f32 %v694, %v766
      %v768 = vpop.f32.mrb[0].mxu0
      %769 = vmatprep.mubr.f32.mxu0 0.0
      %770 = vmatmul.mubr.f32.gmra.mrb[0].mxu0 %v644
      %v771 = vpop.f32.mrb[0].mxu0
      %v772 = vadd.f32 %v694, %v771
      %v773 = vpop.f32.mrb[0].mxu0
      %774 = vmatprep.mubr.f32.mxu0 0.0
      %775 = vmatmul.mubr.f32.gmra.mrb[0].mxu0 %v645
      %v776 = vpop.f32.mrb[0].mxu0
      %v777 = vadd.f32 %v694, %v776
      %v778 = vpop.f32.mrb[0].mxu0
      %779 = vmatprep.mubr.f32.mxu0 0.0
      %780 = vmatmul.mubr.f32.gmra.mrb[0].mxu0 %v646
      %v781 = vpop.f32.mrb[0].mxu0
      %v782 = vadd.f32 %v694, %v781
      %v783 = vpop.f32.mrb[0].mxu0
      %784 = vmatprep.mubr.f32.mxu0 0.0
      %785 = vmatmul.mubr.f32.gmra.mrb[0].mxu0 %v647
      %v786 = vpop.f32.mrb[0].mxu0
      %v787 = vadd.f32 %v694, %v786
      %v788 = vpop.f32.mrb[0].mxu0
      %789 = vmatprep.mubr.f32.mxu0 0.0
      %790 = vmatmul.mubr.f32.gmra.mrb[0].mxu0 %v648
      %v791 = vpop.f32.mrb[0].mxu0
      %v792 = vadd.f32 %v694, %v791
      %v793 = vpop.f32.mrb[0].mxu0
      %794 = vmatprep.mubr.f32.mxu0 0.0
      %795 = vmatmul.mubr.f32.gmra.mrb[0].mxu0 %v649
      %v796 = vpop.f32.mrb[0].mxu0
      %v797 = vadd.f32 %v694, %v796
      %v798 = vpop.f32.mrb[0].mxu0
      %799 = vmatprep.mubr.f32.mxu0 0.0
      %800 = vmatmul.mubr.f32.gmra.mrb[0].mxu0 %v650
      %v801 = vpop.f32.mrb[0].mxu0
      %v802 = vadd.f32 %v694, %v801
      %v803 = vpop.f32.mrb[0].mxu0
      %804 = vmatprep.mubr.f32.mxu0 0.0
      %805 = vmatmul.mubr.f32.gmra.mrb[0].mxu0 %v651
      %v806 = vpop.f32.mrb[0].mxu0
      %v807 = vadd.f32 %v694, %v806
      %v808 = vpop.f32.mrb[0].mxu0
      %809 = vmatprep.mubr.f32.mxu0 0.0
      %810 = vmatmul.mubr.f32.gmra.mrb[0].mxu0 %v652
      %v811 = vpop.f32.mrb[0].mxu0
      %v812 = vadd.f32 %v694, %v811
      %v813 = vpop.f32.mrb[0].mxu0
      %814 = vmatprep.mubr.f32.mxu0 0.0
      %815 = vmatmul.mubr.f32.gmra.mrb[0].mxu0 %v653
      %v816 = vpop.f32.mrb[0].mxu0
      %v817 = vadd.f32 %v694, %v816
      %v818 = vpop.f32.mrb[0].mxu0
      %819 = vmatprep.mubr.f32.mxu0 0.0
      %820 = vmatmul.mubr.f32.gmra.mrb[0].mxu0 %v654
      %v821 = vpop.f32.mrb[0].mxu0
      %v822 = vadd.f32 %v694, %v821
      %v823 = vpop.f32.mrb[0].mxu0
      %824 = vmatprep.mubr.f32.mxu0 0.0
      %825 = vmatmul.mubr.f32.gmra.mrb[0].mxu0 %v655
      %v826 = vpop.f32.mrb[0].mxu0
      %v827 = vadd.f32 %v694, %v826
      %v828 = vpop.f32.mrb[0].mxu0
      %829 = vmatprep.mubr.f32.mxu0 0.0
      %830 = vmatmul.mubr.f32.gmra.mrb[0].mxu0 %v656
      %v831 = vpop.f32.mrb[0].mxu0
      %v832 = vadd.f32 %v694, %v831
      %v833 = vpop.f32.mrb[0].mxu0
      %834 = vmatprep.mubr.f32.mxu0 0.0
      %835 = vmatmul.mubr.f32.gmra.mrb[0].mxu0 %v657
      %v836 = vpop.f32.mrb[0].mxu0
      %v837 = vadd.f32 %v694, %v836
      %v838 = vpop.f32.mrb[0].mxu0
      %839 = vmatprep.mubr.f32.mxu0 0.0
      %840 = vmatmul.mubr.f32.gmra.mrb[0].mxu0 %v658
      %v841 = vpop.f32.mrb[0].mxu0
      %v842 = vadd.f32 %v694, %v841
      %v843 = vpop.f32.mrb[0].mxu0
      %844 = vmatprep.mubr.f32.mxu0 0.0
      %845 = vmatmul.mubr.f32.gmra.mrb[0].mxu0 %v659
      %v846 = vpop.f32.mrb[0].mxu0
      %v847 = vadd.f32 %v694, %v846
      %v848 = vpop.f32.mrb[0].mxu0
      %849 = vmatprep.mubr.f32.mxu0 0.0
      %850 = vmatmul.mubr.f32.gmra.mrb[0].mxu0 %v660
      %v851 = vpop.f32.mrb[0].mxu0
      %v852 = vadd.f32 %v694, %v851
      %v853 = vpop.f32.mrb[0].mxu0
      %854 = vmatprep.mubr.f32.mxu0 0.0
      %855 = vmatmul.mubr.f32.gmra.mrb[0].mxu0 %v661
      %v856 = vpop.f32.mrb[0].mxu0
      %v857 = vadd.f32 %v694, %v856
      %v858 = vpop.f32.mrb[0].mxu0
      %859 = vmatprep.mubr.f32.mxu0 0.0
      %860 = vmatmul.mubr.f32.gmra.mrb[0].mxu0 %v662
      %v861 = vpop.f32.mrb[0].mxu0
      %v862 = vadd.f32 %v694, %v861
      %v863 = vpop.f32.mrb[0].mxu0
      %864 = vmatprep.mubr.f32.mxu0 0.0
      %865 = vmatmul.mubr.f32.gmra.mrb[0].mxu0 %v663
      %v866 = vpop.f32.mrb[0].mxu0
      %v867 = vadd.f32 %v694, %v866
      %v868 = vpop.f32.mrb[0].mxu0
      %869 = vmatprep.mubr.f32.mxu0 0.0
      %870 = vmatmul.mubr.f32.gmra.mrb[0].mxu0 %v664
      %v871 = vpop.f32.mrb[0].mxu0
      %v872 = vadd.f32 %v694, %v871
      %v873 = vpop.f32.mrb[0].mxu0
      %874 = vmatprep.mubr.f32.mxu0 0.0
      %875 = vmatmul.mubr.f32.gmra.mrb[0].mxu0 %v665
      %v876 = vpop.f32.mrb[0].mxu0
      %v877 = vadd.f32 %v694, %v876
      %v878 = vpop.f32.mrb[0].mxu0
      %879 = vmatprep.mubr.f32.mxu0 0.0
      %880 = vmatmul.mubr.f32.gmra.mrb[0].mxu0 %v666
      %v881 = vpop.f32.mrb[0].mxu0
      %v882 = vadd.f32 %v694, %v881
      %v883 = vpop.f32.mrb[0].mxu0
      %884 = vmatprep.mubr.f32.mxu0 0.0
      %885 = vmatmul.mubr.f32.gmra.mrb[0].mxu0 %v667
      %v886 = vpop.f32.mrb[0].mxu0
      %v887 = vadd.f32 %v694, %v886
      %v888 = vpop.f32.mrb[0].mxu0
      %889 = vmatprep.mubr.f32.mxu0 0.0
      %890 = vmatmul.mubr.f32.gmra.mrb[0].mxu0 %v668
      %v891 = vpop.f32.mrb[0].mxu0
      %v892 = vadd.f32 %v694, %v891
      %v893 = vpop.f32.mrb[0].mxu0
      %894 = vmatprep.mubr.f32.mxu0 0.0
      %895 = vmatmul.mubr.f32.gmra.mrb[0].mxu0 %v669
      %v896 = vpop.f32.mrb[0].mxu0
      %v897 = vadd.f32 %v694, %v896
      %v898 = vpop.f32.mrb[0].mxu0
      %899 = vmatprep.mubr.f32.mxu0 0.0
      %900 = vmatmul.mubr.f32.gmra.mrb[0].mxu0 %v670
      %v901 = vpop.f32.mrb[0].mxu0
      %v902 = vadd.f32 %v694, %v901
      %v903 = vpop.f32.mrb[0].mxu0
      %904 = vmatprep.mubr.f32.mxu0 0.0
      %905 = vmatmul.mubr.f32.gmra.mrb[0].mxu0 %v671
      %v906 = vpop.f32.mrb[0].mxu0
      %v907 = vadd.f32 %v694, %v906
      %v908 = vpop.f32.mrb[0].mxu0
      %909 = vmatprep.mubr.f32.mxu0 0.0
      %910 = vmatmul.mubr.f32.gmra.mrb[0].mxu0 %v672
      %v911 = vpop.f32.mrb[0].mxu0
      %v912 = vadd.f32 %v694, %v911
      %v913 = vpop.f32.mrb[0].mxu0
      %914 = vmatprep.mubr.f32.mxu0 0.0
      %915 = vmatmul.mubr.f32.gmra.mrb[0].mxu0 %v673
      %v916 = vpop.f32.mrb[0].mxu0
      %v917 = vadd.f32 %v694, %v916
      %v918 = vpop.f32.mrb[0].mxu0
      %919 = vdwg.mxu0
      %vm920 = vcmp.gt.f32.partialorder %v762, 0.0
      %vm921 = vcmp.gt.f32.partialorder %v767, 0.0
      %vm922 = vcmp.gt.f32.partialorder %v772, 0.0
      %vm923 = vcmp.gt.f32.partialorder %v777, 0.0
      %vm924 = vcmp.gt.f32.partialorder %v782, 0.0
      %vm925 = vcmp.gt.f32.partialorder %v787, 0.0
      %vm926 = vcmp.gt.f32.partialorder %v792, 0.0
      %vm927 = vcmp.gt.f32.partialorder %v797, 0.0
      %vm928 = vcmp.gt.f32.partialorder %v802, 0.0
      %vm929 = vcmp.gt.f32.partialorder %v807, 0.0
      %vm930 = vcmp.gt.f32.partialorder %v812, 0.0
      %vm931 = vcmp.gt.f32.partialorder %v817, 0.0
      %vm932 = vcmp.gt.f32.partialorder %v822, 0.0
      %vm933 = vcmp.gt.f32.partialorder %v827, 0.0
      %vm934 = vcmp.gt.f32.partialorder %v832, 0.0
      %vm935 = vcmp.gt.f32.partialorder %v837, 0.0
      %vm936 = vcmp.gt.f32.partialorder %v842, 0.0
      %vm937 = vcmp.gt.f32.partialorder %v847, 0.0
      %vm938 = vcmp.gt.f32.partialorder %v852, 0.0
      %vm939 = vcmp.gt.f32.partialorder %v857, 0.0
      %vm940 = vcmp.gt.f32.partialorder %v862, 0.0
      %vm941 = vcmp.gt.f32.partialorder %v867, 0.0
      %vm942 = vcmp.gt.f32.partialorder %v872, 0.0
      %vm943 = vcmp.gt.f32.partialorder %v877, 0.0
      %vm944 = vcmp.gt.f32.partialorder %v882, 0.0
      %vm945 = vcmp.gt.f32.partialorder %v887, 0.0
      %vm946 = vcmp.gt.f32.partialorder %v892, 0.0
      %vm947 = vcmp.gt.f32.partialorder %v897, 0.0
      %vm948 = vcmp.gt.f32.partialorder %v902, 0.0
      %vm949 = vcmp.gt.f32.partialorder %v907, 0.0
      %vm950 = vcmp.gt.f32.partialorder %v912, 0.0
      %vm951 = vcmp.gt.f32.partialorder %v917, 0.0
      %v952 = vmul.f32 %v762, 1.442695
      %v953 = vpow.pop %v952
      %v954 = vmul.f32 %v767, 1.442695
      %v955 = vpow.pop %v954
      %v956 = vmul.f32 %v772, 1.442695
      %v957 = vpow.pop %v956
      %v958 = vmul.f32 %v777, 1.442695
      %v959 = vpow.pop %v958
      %v960 = vmul.f32 %v782, 1.442695
      %v961 = vpow.pop %v960
      %v962 = vmul.f32 %v787, 1.442695
      %v963 = vpow.pop %v962
      %v964 = vmul.f32 %v792, 1.442695
      %v965 = vpow.pop %v964
      %v966 = vmul.f32 %v797, 1.442695
      %v967 = vpow.pop %v966
      %v968 = vmul.f32 %v802, 1.442695
      %v969 = vpow.pop %v968
      %v970 = vmul.f32 %v807, 1.442695
      %v971 = vpow.pop %v970
      %v972 = vmul.f32 %v812, 1.442695
      %v973 = vpow.pop %v972
      %v974 = vmul.f32 %v817, 1.442695
      %v975 = vpow.pop %v974
      %v976 = vmul.f32 %v822, 1.442695
      %v977 = vpow.pop %v976
      %v978 = vmul.f32 %v827, 1.442695
      %v979 = vpow.pop %v978
      %v980 = vmul.f32 %v832, 1.442695
      %v981 = vpow.pop %v980
      %v982 = vmul.f32 %v837, 1.442695
      %v983 = vpow.pop %v982
      %v984 = vmul.f32 %v842, 1.442695
      %v985 = vpow.pop %v984
      %v986 = vmul.f32 %v847, 1.442695
      %v987 = vpow.pop %v986
      %v988 = vmul.f32 %v852, 1.442695
      %v989 = vpow.pop %v988
      %v990 = vmul.f32 %v857, 1.442695
      %v991 = vpow.pop %v990
      %v992 = vmul.f32 %v862, 1.442695
      %v993 = vpow.pop %v992
      %v994 = vmul.f32 %v867, 1.442695
      %v995 = vpow.pop %v994
      %v996 = vmul.f32 %v872, 1.442695
      %v997 = vpow.pop %v996
      %v998 = vmul.f32 %v877, 1.442695
      %v999 = vpow.pop %v998
      %v1000 = vmul.f32 %v882, 1.442695
      %v1001 = vpow.pop %v1000
      %v1002 = vmul.f32 %v887, 1.442695
      %v1003 = vpow.pop %v1002
      %v1004 = vmul.f32 %v892, 1.442695
      %v1005 = vpow.pop %v1004
      %v1006 = vmul.f32 %v897, 1.442695
      %v1007 = vpow.pop %v1006
      %v1008 = vmul.f32 %v902, 1.442695
      %v1009 = vpow.pop %v1008
      %v1010 = vmul.f32 %v907, 1.442695
      %v1011 = vpow.pop %v1010
      %v1012 = vmul.f32 %v912, 1.442695
      %v1013 = vpow.pop %v1012
      %v1014 = vmul.f32 %v917, 1.442695
      %v1015 = vpow.pop %v1014
      %v1016 = vsub.f32 %v953, 1.0
      %v1017 = vsub.f32 %v955, 1.0
      %v1018 = vsub.f32 %v957, 1.0
      %v1019 = vsub.f32 %v959, 1.0
      %v1020 = vsub.f32 %v961, 1.0
      %v1021 = vsub.f32 %v963, 1.0
      %v1022 = vsub.f32 %v965, 1.0
      %v1023 = vsub.f32 %v967, 1.0
      %v1024 = vsub.f32 %v969, 1.0
      %v1025 = vsub.f32 %v971, 1.0
      %v1026 = vsub.f32 %v973, 1.0
      %v1027 = vsub.f32 %v975, 1.0
      %v1028 = vsub.f32 %v977, 1.0
      %v1029 = vsub.f32 %v979, 1.0
      %v1030 = vsub.f32 %v981, 1.0
      %v1031 = vsub.f32 %v983, 1.0
      %v1032 = vsub.f32 %v985, 1.0
      %v1033 = vsub.f32 %v987, 1.0
      %v1034 = vsub.f32 %v989, 1.0
      %v1035 = vsub.f32 %v991, 1.0
      %v1036 = vsub.f32 %v993, 1.0
      %v1037 = vsub.f32 %v995, 1.0
      %v1038 = vsub.f32 %v997, 1.0
      %v1039 = vsub.f32 %v999, 1.0
      %v1040 = vsub.f32 %v1001, 1.0
      %v1041 = vsub.f32 %v1003, 1.0
      %v1042 = vsub.f32 %v1005, 1.0
      %v1043 = vsub.f32 %v1007, 1.0
      %v1044 = vsub.f32 %v1009, 1.0
      %v1045 = vsub.f32 %v1011, 1.0
      %v1046 = vsub.f32 %v1013, 1.0
      %v1047 = vsub.f32 %v1015, 1.0
      %v1048 = vsel %vm920, %v762, %v1016
      %v1049 = vsel %vm921, %v767, %v1017
      %v1050 = vsel %vm922, %v772, %v1018
      %v1051 = vsel %vm923, %v777, %v1019
      %v1052 = vsel %vm924, %v782, %v1020
      %v1053 = vsel %vm925, %v787, %v1021
      %v1054 = vsel %vm926, %v792, %v1022
      %v1055 = vsel %vm927, %v797, %v1023
      %v1056 = vsel %vm928, %v802, %v1024
      %v1057 = vsel %vm929, %v807, %v1025
      %v1058 = vsel %vm930, %v812, %v1026
      %v1059 = vsel %vm931, %v817, %v1027
      %v1060 = vsel %vm932, %v822, %v1028
      %v1061 = vsel %vm933, %v827, %v1029
      %v1062 = vsel %vm934, %v832, %v1030
      %v1063 = vsel %vm935, %v837, %v1031
      %v1064 = vsel %vm936, %v842, %v1032
      %v1065 = vsel %vm937, %v847, %v1033
      %v1066 = vsel %vm938, %v852, %v1034
      %v1067 = vsel %vm939, %v857, %v1035
      %v1068 = vsel %vm940, %v862, %v1036
      %v1069 = vsel %vm941, %v867, %v1037
      %v1070 = vsel %vm942, %v872, %v1038
      %v1071 = vsel %vm943, %v877, %v1039
      %v1072 = vsel %vm944, %v882, %v1040
      %v1073 = vsel %vm945, %v887, %v1041
      %v1074 = vsel %vm946, %v892, %v1042
      %v1075 = vsel %vm947, %v897, %v1043
      %v1076 = vsel %vm948, %v902, %v1044
      %v1077 = vsel %vm949, %v907, %v1045
      %v1078 = vsel %vm950, %v912, %v1046
      %v1079 = vsel %vm951, %v917, %v1047
      %v1080 = vld [vmem:[%s1 + $0xd0] sm:$0xff]
      %v1081 = vld [vmem:[%s1 + $0xd8] sm:$0xff]
      %v1082 = vld [vmem:[%s1 + $0xe0] sm:$0xff]
      %v1083 = vld [vmem:[%s1 + $0xe8] sm:$0xff]
      %v1084 = vld [vmem:[%s1 + $0xf0] sm:$0xff]
      %v1085 = vld [vmem:[%s1 + $0xf8] sm:$0xff]
      %v1086 = vld [vmem:[%s1 + $0x100] sm:$0xff]
      %v1087 = vld [vmem:[%s1 + $0x108] sm:$0xff]
      %v1088 = vld [vmem:[%s1 + $0x110] sm:$0xff]
      %v1089 = vld [vmem:[%s1 + $0x118] sm:$0xff]
      %v1090 = vld [vmem:[%s1 + $0x120] sm:$0xff]
      %v1091 = vld [vmem:[%s1 + $0x128] sm:$0xff]
      %v1092 = vld [vmem:[%s1 + $0x130] sm:$0xff]
      %v1093 = vld [vmem:[%s1 + $0x138] sm:$0xff]
      %v1094 = vld [vmem:[%s1 + $0x140] sm:$0xff]
      %v1095 = vld [vmem:[%s1 + $0x148] sm:$0xff]
      %v1096 = vld [vmem:[%s1 + $0x150] sm:$0x1]
      %v1097 = vlaneseq
      %v1098 = vshrl.u32 %v1097, 7
      %v1099 = vsub.s32 0, %v1098
      %v1100 = vrot.slane %v1096, %v1099
      %1101 = vmatprep.subr.mxu0 0.0
      %1102 = vmatpush1.msra.mxu0 %v1080
      %1103 = vmatprep.subr.mxu0 0.0
      %1104 = vmatpush1.msra.mxu0 %v1081
      %1105 = vmatprep.subr.mxu0 0.0
      %1106 = vmatpush1.msra.mxu0 %v1082
      %1107 = vmatprep.subr.mxu0 0.0
      %1108 = vmatpush1.msra.mxu0 %v1083
      %1109 = vmatprep.subr.mxu0 0.0
      %1110 = vmatpush1.msra.mxu0 %v1084
      %1111 = vmatprep.subr.mxu0 0.0
      %1112 = vmatpush1.msra.mxu0 %v1085
      %1113 = vmatprep.subr.mxu0 0.0
      %1114 = vmatpush1.msra.mxu0 %v1086
      %1115 = vmatprep.subr.mxu0 0.0
      %1116 = vmatpush1.msra.mxu0 %v1087
      %1117 = vmatprep.subr.mxu0 0.0
      %1118 = vmatpush1.msra.mxu0 %v1088
      %1119 = vmatprep.subr.mxu0 0.0
      %1120 = vmatpush1.msra.mxu0 %v1089
      %1121 = vmatprep.subr.mxu0 0.0
      %1122 = vmatpush1.msra.mxu0 %v1090
      %1123 = vmatprep.subr.mxu0 0.0
      %1124 = vmatpush1.msra.mxu0 %v1091
      %1125 = vmatprep.subr.mxu0 0.0
      %1126 = vmatpush1.msra.mxu0 %v1092
      %1127 = vmatprep.subr.mxu0 0.0
      %1128 = vmatpush1.msra.mxu0 %v1093
      %1129 = vmatprep.subr.mxu0 0.0
      %1130 = vmatpush1.msra.mxu0 %v1094
      %1131 = vmatprep.subr.mxu0 0.0
      %1132 = vmatpush1.msra.mxu0 %v1095
      %1133 = vmatprep.subr.mxu0 0.0
      %1134 = vmatpush1.msra.mxu0 0.0
      %1135 = vmatprep.subr.mxu0 0.0
      %1136 = vmatpush1.msra.mxu0 0.0
      %1137 = vmatprep.subr.mxu0 0.0
      %1138 = vmatpush1.msra.mxu0 0.0
      %1139 = vmatprep.subr.mxu0 0.0
      %1140 = vmatpush1.msra.mxu0 0.0
      %1141 = vmatprep.subr.mxu0 0.0
      %1142 = vmatpush1.msra.mxu0 0.0
      %1143 = vmatprep.subr.mxu0 0.0
      %1144 = vmatpush1.msra.mxu0 0.0
      %1145 = vmatprep.subr.mxu0 0.0
      %1146 = vmatpush1.msra.mxu0 0.0
      %1147 = vmatprep.subr.mxu0 0.0
      %1148 = vmatpush1.msra.mxu0 0.0
      %1149 = vmatprep.subr.mxu0 0.0
      %1150 = vmatpush1.msra.mxu0 0.0
      %1151 = vmatprep.subr.mxu0 0.0
      %1152 = vmatpush1.msra.mxu0 0.0
      %1153 = vmatprep.subr.mxu0 0.0
      %1154 = vmatpush1.msra.mxu0 0.0
      %1155 = vmatprep.subr.mxu0 0.0
      %1156 = vmatpush1.msra.mxu0 0.0
      %1157 = vmatprep.subr.mxu0 0.0
      %1158 = vmatpush1.msra.mxu0 0.0
      %1159 = vmatprep.subr.mxu0 0.0
      %1160 = vmatpush1.msra.mxu0 0.0
      %1161 = vmatprep.subr.mxu0 0.0
      %1162 = vmatpush1.msra.mxu0 0.0
      %1163 = vmatprep.subr.mxu0 0.0
      %1164 = vmatpush1.msra.mxu0 0.0
      %1165 = vmatprep.mubr.f32.mxu0 0.0
      %1166 = vmatmul.mubr.f32.gmra.mrb[0].mxu0 %v1048
      %v1167 = vpop.f32.mrb[0].mxu0
      %v1168 = vadd.f32 %v1100, %v1167
      %v1169 = vpop.f32.mrb[0].mxu0
      %1170 = vmatprep.mubr.f32.mxu0 0.0
      %1171 = vmatmul.mubr.f32.gmra.mrb[0].mxu0 %v1049
      %v1172 = vpop.f32.mrb[0].mxu0
      %v1173 = vadd.f32 %v1100, %v1172
      %v1174 = vpop.f32.mrb[0].mxu0
      %1175 = vmatprep.mubr.f32.mxu0 0.0
      %1176 = vmatmul.mubr.f32.gmra.mrb[0].mxu0 %v1050
      %v1177 = vpop.f32.mrb[0].mxu0
      %v1178 = vadd.f32 %v1100, %v1177
      %v1179 = vpop.f32.mrb[0].mxu0
      %1180 = vmatprep.mubr.f32.mxu0 0.0
      %1181 = vmatmul.mubr.f32.gmra.mrb[0].mxu0 %v1051
      %v1182 = vpop.f32.mrb[0].mxu0
      %v1183 = vadd.f32 %v1100, %v1182
      %v1184 = vpop.f32.mrb[0].mxu0
      %1185 = vmatprep.mubr.f32.mxu0 0.0
      %1186 = vmatmul.mubr.f32.gmra.mrb[0].mxu0 %v1052
      %v1187 = vpop.f32.mrb[0].mxu0
      %v1188 = vadd.f32 %v1100, %v1187
      %v1189 = vpop.f32.mrb[0].mxu0
      %1190 = vmatprep.mubr.f32.mxu0 0.0
      %1191 = vmatmul.mubr.f32.gmra.mrb[0].mxu0 %v1053
      %v1192 = vpop.f32.mrb[0].mxu0
      %v1193 = vadd.f32 %v1100, %v1192
      %v1194 = vpop.f32.mrb[0].mxu0
      %1195 = vmatprep.mubr.f32.mxu0 0.0
      %1196 = vmatmul.mubr.f32.gmra.mrb[0].mxu0 %v1054
      %v1197 = vpop.f32.mrb[0].mxu0
      %v1198 = vadd.f32 %v1100, %v1197
      %v1199 = vpop.f32.mrb[0].mxu0
      %1200 = vmatprep.mubr.f32.mxu0 0.0
      %1201 = vmatmul.mubr.f32.gmra.mrb[0].mxu0 %v1055
      %v1202 = vpop.f32.mrb[0].mxu0
      %v1203 = vadd.f32 %v1100, %v1202
      %v1204 = vpop.f32.mrb[0].mxu0
      %1205 = vmatprep.mubr.f32.mxu0 0.0
      %1206 = vmatmul.mubr.f32.gmra.mrb[0].mxu0 %v1056
      %v1207 = vpop.f32.mrb[0].mxu0
      %v1208 = vadd.f32 %v1100, %v1207
      %v1209 = vpop.f32.mrb[0].mxu0
      %1210 = vmatprep.mubr.f32.mxu0 0.0
      %1211 = vmatmul.mubr.f32.gmra.mrb[0].mxu0 %v1057
      %v1212 = vpop.f32.mrb[0].mxu0
      %v1213 = vadd.f32 %v1100, %v1212
      %v1214 = vpop.f32.mrb[0].mxu0
      %1215 = vmatprep.mubr.f32.mxu0 0.0
      %1216 = vmatmul.mubr.f32.gmra.mrb[0].mxu0 %v1058
      %v1217 = vpop.f32.mrb[0].mxu0
      %v1218 = vadd.f32 %v1100, %v1217
      %v1219 = vpop.f32.mrb[0].mxu0
      %1220 = vmatprep.mubr.f32.mxu0 0.0
      %1221 = vmatmul.mubr.f32.gmra.mrb[0].mxu0 %v1059
      %v1222 = vpop.f32.mrb[0].mxu0
      %v1223 = vadd.f32 %v1100, %v1222
      %v1224 = vpop.f32.mrb[0].mxu0
      %1225 = vmatprep.mubr.f32.mxu0 0.0
      %1226 = vmatmul.mubr.f32.gmra.mrb[0].mxu0 %v1060
      %v1227 = vpop.f32.mrb[0].mxu0
      %v1228 = vadd.f32 %v1100, %v1227
      %v1229 = vpop.f32.mrb[0].mxu0
      %1230 = vmatprep.mubr.f32.mxu0 0.0
      %1231 = vmatmul.mubr.f32.gmra.mrb[0].mxu0 %v1061
      %v1232 = vpop.f32.mrb[0].mxu0
      %v1233 = vadd.f32 %v1100, %v1232
      %v1234 = vpop.f32.mrb[0].mxu0
      %1235 = vmatprep.mubr.f32.mxu0 0.0
      %1236 = vmatmul.mubr.f32.gmra.mrb[0].mxu0 %v1062
      %v1237 = vpop.f32.mrb[0].mxu0
      %v1238 = vadd.f32 %v1100, %v1237
      %v1239 = vpop.f32.mrb[0].mxu0
      %1240 = vmatprep.mubr.f32.mxu0 0.0
      %1241 = vmatmul.mubr.f32.gmra.mrb[0].mxu0 %v1063
      %v1242 = vpop.f32.mrb[0].mxu0
      %v1243 = vadd.f32 %v1100, %v1242
      %v1244 = vpop.f32.mrb[0].mxu0
      %1245 = vmatprep.mubr.f32.mxu0 0.0
      %1246 = vmatmul.mubr.f32.gmra.mrb[0].mxu0 %v1064
      %v1247 = vpop.f32.mrb[0].mxu0
      %v1248 = vadd.f32 %v1100, %v1247
      %v1249 = vpop.f32.mrb[0].mxu0
      %1250 = vmatprep.mubr.f32.mxu0 0.0
      %1251 = vmatmul.mubr.f32.gmra.mrb[0].mxu0 %v1065
      %v1252 = vpop.f32.mrb[0].mxu0
      %v1253 = vadd.f32 %v1100, %v1252
      %v1254 = vpop.f32.mrb[0].mxu0
      %1255 = vmatprep.mubr.f32.mxu0 0.0
      %1256 = vmatmul.mubr.f32.gmra.mrb[0].mxu0 %v1066
      %v1257 = vpop.f32.mrb[0].mxu0
      %v1258 = vadd.f32 %v1100, %v1257
      %v1259 = vpop.f32.mrb[0].mxu0
      %1260 = vmatprep.mubr.f32.mxu0 0.0
      %1261 = vmatmul.mubr.f32.gmra.mrb[0].mxu0 %v1067
      %v1262 = vpop.f32.mrb[0].mxu0
      %v1263 = vadd.f32 %v1100, %v1262
      %v1264 = vpop.f32.mrb[0].mxu0
      %1265 = vmatprep.mubr.f32.mxu0 0.0
      %1266 = vmatmul.mubr.f32.gmra.mrb[0].mxu0 %v1068
      %v1267 = vpop.f32.mrb[0].mxu0
      %v1268 = vadd.f32 %v1100, %v1267
      %v1269 = vpop.f32.mrb[0].mxu0
      %1270 = vmatprep.mubr.f32.mxu0 0.0
      %1271 = vmatmul.mubr.f32.gmra.mrb[0].mxu0 %v1069
      %v1272 = vpop.f32.mrb[0].mxu0
      %v1273 = vadd.f32 %v1100, %v1272
      %v1274 = vpop.f32.mrb[0].mxu0
      %1275 = vmatprep.mubr.f32.mxu0 0.0
      %1276 = vmatmul.mubr.f32.gmra.mrb[0].mxu0 %v1070
      %v1277 = vpop.f32.mrb[0].mxu0
      %v1278 = vadd.f32 %v1100, %v1277
      %v1279 = vpop.f32.mrb[0].mxu0
      %1280 = vmatprep.mubr.f32.mxu0 0.0
      %1281 = vmatmul.mubr.f32.gmra.mrb[0].mxu0 %v1071
      %v1282 = vpop.f32.mrb[0].mxu0
      %v1283 = vadd.f32 %v1100, %v1282
      %v1284 = vpop.f32.mrb[0].mxu0
      %1285 = vmatprep.mubr.f32.mxu0 0.0
      %1286 = vmatmul.mubr.f32.gmra.mrb[0].mxu0 %v1072
      %v1287 = vpop.f32.mrb[0].mxu0
      %v1288 = vadd.f32 %v1100, %v1287
      %v1289 = vpop.f32.mrb[0].mxu0
      %1290 = vmatprep.mubr.f32.mxu0 0.0
      %1291 = vmatmul.mubr.f32.gmra.mrb[0].mxu0 %v1073
      %v1292 = vpop.f32.mrb[0].mxu0
      %v1293 = vadd.f32 %v1100, %v1292
      %v1294 = vpop.f32.mrb[0].mxu0
      %1295 = vmatprep.mubr.f32.mxu0 0.0
      %1296 = vmatmul.mubr.f32.gmra.mrb[0].mxu0 %v1074
      %v1297 = vpop.f32.mrb[0].mxu0
      %v1298 = vadd.f32 %v1100, %v1297
      %v1299 = vpop.f32.mrb[0].mxu0
      %1300 = vmatprep.mubr.f32.mxu0 0.0
      %1301 = vmatmul.mubr.f32.gmra.mrb[0].mxu0 %v1075
      %v1302 = vpop.f32.mrb[0].mxu0
      %v1303 = vadd.f32 %v1100, %v1302
      %v1304 = vpop.f32.mrb[0].mxu0
      %1305 = vmatprep.mubr.f32.mxu0 0.0
      %1306 = vmatmul.mubr.f32.gmra.mrb[0].mxu0 %v1076
      %v1307 = vpop.f32.mrb[0].mxu0
      %v1308 = vadd.f32 %v1100, %v1307
      %v1309 = vpop.f32.mrb[0].mxu0
      %1310 = vmatprep.mubr.f32.mxu0 0.0
      %1311 = vmatmul.mubr.f32.gmra.mrb[0].mxu0 %v1077
      %v1312 = vpop.f32.mrb[0].mxu0
      %v1313 = vadd.f32 %v1100, %v1312
      %v1314 = vpop.f32.mrb[0].mxu0
      %1315 = vmatprep.mubr.f32.mxu0 0.0
      %1316 = vmatmul.mubr.f32.gmra.mrb[0].mxu0 %v1078
      %v1317 = vpop.f32.mrb[0].mxu0
      %v1318 = vadd.f32 %v1100, %v1317
      %v1319 = vpop.f32.mrb[0].mxu0
      %1320 = vmatprep.mubr.f32.mxu0 0.0
      %1321 = vmatmul.mubr.f32.gmra.mrb[0].mxu0 %v1079
      %v1322 = vpop.f32.mrb[0].mxu0
      %v1323 = vadd.f32 %v1100, %v1322
      %v1324 = vpop.f32.mrb[0].mxu0
      %1325 = vdwg.mxu0
      %v1326 = vld [vmem:[%s1 + $0x158] sm:$0xff]
      %v1327 = vld [vmem:[%s1 + $0x160] sm:$0xff]
      %v1328 = vld [vmem:[%s1 + $0x168] sm:$0xff]
      %v1329 = vld [vmem:[%s1 + $0x170] sm:$0xff]
      %v1330 = vld [vmem:[%s1 + $0x178] sm:$0xff]
      %v1331 = vld [vmem:[%s1 + $0x180] sm:$0xff]
      %v1332 = vld [vmem:[%s1 + $0x188] sm:$0xff]
      %v1333 = vld [vmem:[%s1 + $0x190] sm:$0xff]
      %v1334 = vld [vmem:[%s1 + $0x198] sm:$0xff]
      %v1335 = vld [vmem:[%s1 + $0x1a0] sm:$0xff]
      %v1336 = vld [vmem:[%s1 + $0x1a8] sm:$0xff]
      %v1337 = vld [vmem:[%s1 + $0x1b0] sm:$0xff]
      %v1338 = vld [vmem:[%s1 + $0x1b8] sm:$0xff]
      %v1339 = vld [vmem:[%s1 + $0x1c0] sm:$0xff]
      %v1340 = vld [vmem:[%s1 + $0x1c8] sm:$0xff]
      %v1341 = vld [vmem:[%s1 + $0x1d0] sm:$0xff]
      %v1342 = vld [vmem:[%s1 + $0x1d8] sm:$0x1]
      %v1343 = vlaneseq
      %v1344 = vshrl.u32 %v1343, 7
      %v1345 = vsub.s32 0, %v1344
      %v1346 = vrot.slane %v1342, %v1345
      %1347 = vmatprep.subr.mxu0 0.0
      %1348 = vmatpush1.msra.mxu0 %v1326
      %1349 = vmatprep.subr.mxu0 0.0
      %1350 = vmatpush1.msra.mxu0 %v1327
      %1351 = vmatprep.subr.mxu0 0.0
      %1352 = vmatpush1.msra.mxu0 %v1328
      %1353 = vmatprep.subr.mxu0 0.0
      %1354 = vmatpush1.msra.mxu0 %v1329
      %1355 = vmatprep.subr.mxu0 0.0
      %1356 = vmatpush1.msra.mxu0 %v1330
      %1357 = vmatprep.subr.mxu0 0.0
      %1358 = vmatpush1.msra.mxu0 %v1331
      %1359 = vmatprep.subr.mxu0 0.0
      %1360 = vmatpush1.msra.mxu0 %v1332
      %1361 = vmatprep.subr.mxu0 0.0
      %1362 = vmatpush1.msra.mxu0 %v1333
      %1363 = vmatprep.subr.mxu0 0.0
      %1364 = vmatpush1.msra.mxu0 %v1334
      %1365 = vmatprep.subr.mxu0 0.0
      %1366 = vmatpush1.msra.mxu0 %v1335
      %1367 = vmatprep.subr.mxu0 0.0
      %1368 = vmatpush1.msra.mxu0 %v1336
      %1369 = vmatprep.subr.mxu0 0.0
      %1370 = vmatpush1.msra.mxu0 %v1337
      %1371 = vmatprep.subr.mxu0 0.0
      %1372 = vmatpush1.msra.mxu0 %v1338
      %1373 = vmatprep.subr.mxu0 0.0
      %1374 = vmatpush1.msra.mxu0 %v1339
      %1375 = vmatprep.subr.mxu0 0.0
      %1376 = vmatpush1.msra.mxu0 %v1340
      %1377 = vmatprep.subr.mxu0 0.0
      %1378 = vmatpush1.msra.mxu0 %v1341
      %1379 = vmatprep.subr.mxu0 0.0
      %1380 = vmatpush1.msra.mxu0 0.0
      %1381 = vmatprep.subr.mxu0 0.0
      %1382 = vmatpush1.msra.mxu0 0.0
      %1383 = vmatprep.subr.mxu0 0.0
      %1384 = vmatpush1.msra.mxu0 0.0
      %1385 = vmatprep.subr.mxu0 0.0
      %1386 = vmatpush1.msra.mxu0 0.0
      %1387 = vmatprep.subr.mxu0 0.0
      %1388 = vmatpush1.msra.mxu0 0.0
      %1389 = vmatprep.subr.mxu0 0.0
      %1390 = vmatpush1.msra.mxu0 0.0
      %1391 = vmatprep.subr.mxu0 0.0
      %1392 = vmatpush1.msra.mxu0 0.0
      %1393 = vmatprep.subr.mxu0 0.0
      %1394 = vmatpush1.msra.mxu0 0.0
      %1395 = vmatprep.subr.mxu0 0.0
      %1396 = vmatpush1.msra.mxu0 0.0
      %1397 = vmatprep.subr.mxu0 0.0
      %1398 = vmatpush1.msra.mxu0 0.0
      %1399 = vmatprep.subr.mxu0 0.0
      %1400 = vmatpush1.msra.mxu0 0.0
      %1401 = vmatprep.subr.mxu0 0.0
      %1402 = vmatpush1.msra.mxu0 0.0
      %1403 = vmatprep.subr.mxu0 0.0
      %1404 = vmatpush1.msra.mxu0 0.0
      %1405 = vmatprep.subr.mxu0 0.0
      %1406 = vmatpush1.msra.mxu0 0.0
      %1407 = vmatprep.subr.mxu0 0.0
      %1408 = vmatpush1.msra.mxu0 0.0
      %1409 = vmatprep.subr.mxu0 0.0
      %1410 = vmatpush1.msra.mxu0 0.0
      %1411 = vmatprep.mubr.f32.mxu0 0.0
      %1412 = vmatmul.mubr.f32.gmra.mrb[0].mxu0 %v1168
      %v1413 = vpop.f32.mrb[0].mxu0
      %v1414 = vadd.f32 %v1346, %v1413
      %v1415 = vpop.f32.mrb[0].mxu0
      %1416 = vmatprep.mubr.f32.mxu0 0.0
      %1417 = vmatmul.mubr.f32.gmra.mrb[0].mxu0 %v1173
      %v1418 = vpop.f32.mrb[0].mxu0
      %v1419 = vadd.f32 %v1346, %v1418
      %v1420 = vpop.f32.mrb[0].mxu0
      %1421 = vmatprep.mubr.f32.mxu0 0.0
      %1422 = vmatmul.mubr.f32.gmra.mrb[0].mxu0 %v1178
      %v1423 = vpop.f32.mrb[0].mxu0
      %v1424 = vadd.f32 %v1346, %v1423
      %v1425 = vpop.f32.mrb[0].mxu0
      %1426 = vmatprep.mubr.f32.mxu0 0.0
      %1427 = vmatmul.mubr.f32.gmra.mrb[0].mxu0 %v1183
      %v1428 = vpop.f32.mrb[0].mxu0
      %v1429 = vadd.f32 %v1346, %v1428
      %v1430 = vpop.f32.mrb[0].mxu0
      %1431 = vmatprep.mubr.f32.mxu0 0.0
      %1432 = vmatmul.mubr.f32.gmra.mrb[0].mxu0 %v1188
      %v1433 = vpop.f32.mrb[0].mxu0
      %v1434 = vadd.f32 %v1346, %v1433
      %v1435 = vpop.f32.mrb[0].mxu0
      %1436 = vmatprep.mubr.f32.mxu0 0.0
      %1437 = vmatmul.mubr.f32.gmra.mrb[0].mxu0 %v1193
      %v1438 = vpop.f32.mrb[0].mxu0
      %v1439 = vadd.f32 %v1346, %v1438
      %v1440 = vpop.f32.mrb[0].mxu0
      %1441 = vmatprep.mubr.f32.mxu0 0.0
      %1442 = vmatmul.mubr.f32.gmra.mrb[0].mxu0 %v1198
      %v1443 = vpop.f32.mrb[0].mxu0
      %v1444 = vadd.f32 %v1346, %v1443
      %v1445 = vpop.f32.mrb[0].mxu0
      %1446 = vmatprep.mubr.f32.mxu0 0.0
      %1447 = vmatmul.mubr.f32.gmra.mrb[0].mxu0 %v1203
      %v1448 = vpop.f32.mrb[0].mxu0
      %v1449 = vadd.f32 %v1346, %v1448
      %v1450 = vpop.f32.mrb[0].mxu0
      %1451 = vmatprep.mubr.f32.mxu0 0.0
      %1452 = vmatmul.mubr.f32.gmra.mrb[0].mxu0 %v1208
      %v1453 = vpop.f32.mrb[0].mxu0
      %v1454 = vadd.f32 %v1346, %v1453
      %v1455 = vpop.f32.mrb[0].mxu0
      %1456 = vmatprep.mubr.f32.mxu0 0.0
      %1457 = vmatmul.mubr.f32.gmra.mrb[0].mxu0 %v1213
      %v1458 = vpop.f32.mrb[0].mxu0
      %v1459 = vadd.f32 %v1346, %v1458
      %v1460 = vpop.f32.mrb[0].mxu0
      %1461 = vmatprep.mubr.f32.mxu0 0.0
      %1462 = vmatmul.mubr.f32.gmra.mrb[0].mxu0 %v1218
      %v1463 = vpop.f32.mrb[0].mxu0
      %v1464 = vadd.f32 %v1346, %v1463
      %v1465 = vpop.f32.mrb[0].mxu0
      %1466 = vmatprep.mubr.f32.mxu0 0.0
      %1467 = vmatmul.mubr.f32.gmra.mrb[0].mxu0 %v1223
      %v1468 = vpop.f32.mrb[0].mxu0
      %v1469 = vadd.f32 %v1346, %v1468
      %v1470 = vpop.f32.mrb[0].mxu0
      %1471 = vmatprep.mubr.f32.mxu0 0.0
      %1472 = vmatmul.mubr.f32.gmra.mrb[0].mxu0 %v1228
      %v1473 = vpop.f32.mrb[0].mxu0
      %v1474 = vadd.f32 %v1346, %v1473
      %v1475 = vpop.f32.mrb[0].mxu0
      %1476 = vmatprep.mubr.f32.mxu0 0.0
      %1477 = vmatmul.mubr.f32.gmra.mrb[0].mxu0 %v1233
      %v1478 = vpop.f32.mrb[0].mxu0
      %v1479 = vadd.f32 %v1346, %v1478
      %v1480 = vpop.f32.mrb[0].mxu0
      %1481 = vmatprep.mubr.f32.mxu0 0.0
      %1482 = vmatmul.mubr.f32.gmra.mrb[0].mxu0 %v1238
      %v1483 = vpop.f32.mrb[0].mxu0
      %v1484 = vadd.f32 %v1346, %v1483
      %v1485 = vpop.f32.mrb[0].mxu0
      %1486 = vmatprep.mubr.f32.mxu0 0.0
      %1487 = vmatmul.mubr.f32.gmra.mrb[0].mxu0 %v1243
      %v1488 = vpop.f32.mrb[0].mxu0
      %v1489 = vadd.f32 %v1346, %v1488
      %v1490 = vpop.f32.mrb[0].mxu0
      %1491 = vmatprep.mubr.f32.mxu0 0.0
      %1492 = vmatmul.mubr.f32.gmra.mrb[0].mxu0 %v1248
      %v1493 = vpop.f32.mrb[0].mxu0
      %v1494 = vadd.f32 %v1346, %v1493
      %v1495 = vpop.f32.mrb[0].mxu0
      %1496 = vmatprep.mubr.f32.mxu0 0.0
      %1497 = vmatmul.mubr.f32.gmra.mrb[0].mxu0 %v1253
      %v1498 = vpop.f32.mrb[0].mxu0
      %v1499 = vadd.f32 %v1346, %v1498
      %v1500 = vpop.f32.mrb[0].mxu0
      %1501 = vmatprep.mubr.f32.mxu0 0.0
      %1502 = vmatmul.mubr.f32.gmra.mrb[0].mxu0 %v1258
      %v1503 = vpop.f32.mrb[0].mxu0
      %v1504 = vadd.f32 %v1346, %v1503
      %v1505 = vpop.f32.mrb[0].mxu0
      %1506 = vmatprep.mubr.f32.mxu0 0.0
      %1507 = vmatmul.mubr.f32.gmra.mrb[0].mxu0 %v1263
      %v1508 = vpop.f32.mrb[0].mxu0
      %v1509 = vadd.f32 %v1346, %v1508
      %v1510 = vpop.f32.mrb[0].mxu0
      %1511 = vmatprep.mubr.f32.mxu0 0.0
      %1512 = vmatmul.mubr.f32.gmra.mrb[0].mxu0 %v1268
      %v1513 = vpop.f32.mrb[0].mxu0
      %v1514 = vadd.f32 %v1346, %v1513
      %v1515 = vpop.f32.mrb[0].mxu0
      %1516 = vmatprep.mubr.f32.mxu0 0.0
      %1517 = vmatmul.mubr.f32.gmra.mrb[0].mxu0 %v1273
      %v1518 = vpop.f32.mrb[0].mxu0
      %v1519 = vadd.f32 %v1346, %v1518
      %v1520 = vpop.f32.mrb[0].mxu0
      %1521 = vmatprep.mubr.f32.mxu0 0.0
      %1522 = vmatmul.mubr.f32.gmra.mrb[0].mxu0 %v1278
      %v1523 = vpop.f32.mrb[0].mxu0
      %v1524 = vadd.f32 %v1346, %v1523
      %v1525 = vpop.f32.mrb[0].mxu0
      %1526 = vmatprep.mubr.f32.mxu0 0.0
      %1527 = vmatmul.mubr.f32.gmra.mrb[0].mxu0 %v1283
      %v1528 = vpop.f32.mrb[0].mxu0
      %v1529 = vadd.f32 %v1346, %v1528
      %v1530 = vpop.f32.mrb[0].mxu0
      %1531 = vmatprep.mubr.f32.mxu0 0.0
      %1532 = vmatmul.mubr.f32.gmra.mrb[0].mxu0 %v1288
      %v1533 = vpop.f32.mrb[0].mxu0
      %v1534 = vadd.f32 %v1346, %v1533
      %v1535 = vpop.f32.mrb[0].mxu0
      %1536 = vmatprep.mubr.f32.mxu0 0.0
      %1537 = vmatmul.mubr.f32.gmra.mrb[0].mxu0 %v1293
      %v1538 = vpop.f32.mrb[0].mxu0
      %v1539 = vadd.f32 %v1346, %v1538
      %v1540 = vpop.f32.mrb[0].mxu0
      %1541 = vmatprep.mubr.f32.mxu0 0.0
      %1542 = vmatmul.mubr.f32.gmra.mrb[0].mxu0 %v1298
      %v1543 = vpop.f32.mrb[0].mxu0
      %v1544 = vadd.f32 %v1346, %v1543
      %v1545 = vpop.f32.mrb[0].mxu0
      %1546 = vmatprep.mubr.f32.mxu0 0.0
      %1547 = vmatmul.mubr.f32.gmra.mrb[0].mxu0 %v1303
      %v1548 = vpop.f32.mrb[0].mxu0
      %v1549 = vadd.f32 %v1346, %v1548
      %v1550 = vpop.f32.mrb[0].mxu0
      %1551 = vmatprep.mubr.f32.mxu0 0.0
      %1552 = vmatmul.mubr.f32.gmra.mrb[0].mxu0 %v1308
      %v1553 = vpop.f32.mrb[0].mxu0
      %v1554 = vadd.f32 %v1346, %v1553
      %v1555 = vpop.f32.mrb[0].mxu0
      %1556 = vmatprep.mubr.f32.mxu0 0.0
      %1557 = vmatmul.mubr.f32.gmra.mrb[0].mxu0 %v1313
      %v1558 = vpop.f32.mrb[0].mxu0
      %v1559 = vadd.f32 %v1346, %v1558
      %v1560 = vpop.f32.mrb[0].mxu0
      %1561 = vmatprep.mubr.f32.mxu0 0.0
      %1562 = vmatmul.mubr.f32.gmra.mrb[0].mxu0 %v1318
      %v1563 = vpop.f32.mrb[0].mxu0
      %v1564 = vadd.f32 %v1346, %v1563
      %v1565 = vpop.f32.mrb[0].mxu0
      %1566 = vmatprep.mubr.f32.mxu0 0.0
      %1567 = vmatmul.mubr.f32.gmra.mrb[0].mxu0 %v1323
      %v1568 = vpop.f32.mrb[0].mxu0
      %v1569 = vadd.f32 %v1346, %v1568
      %v1570 = vpop.f32.mrb[0].mxu0
      %1571 = vdwg.mxu0
      %vm1572 = vcmp.gt.f32.partialorder %v1414, 0.0
      %vm1573 = vcmp.gt.f32.partialorder %v1419, 0.0
      %vm1574 = vcmp.gt.f32.partialorder %v1424, 0.0
      %vm1575 = vcmp.gt.f32.partialorder %v1429, 0.0
      %vm1576 = vcmp.gt.f32.partialorder %v1434, 0.0
      %vm1577 = vcmp.gt.f32.partialorder %v1439, 0.0
      %vm1578 = vcmp.gt.f32.partialorder %v1444, 0.0
      %vm1579 = vcmp.gt.f32.partialorder %v1449, 0.0
      %vm1580 = vcmp.gt.f32.partialorder %v1454, 0.0
      %vm1581 = vcmp.gt.f32.partialorder %v1459, 0.0
      %vm1582 = vcmp.gt.f32.partialorder %v1464, 0.0
      %vm1583 = vcmp.gt.f32.partialorder %v1469, 0.0
      %vm1584 = vcmp.gt.f32.partialorder %v1474, 0.0
      %vm1585 = vcmp.gt.f32.partialorder %v1479, 0.0
      %vm1586 = vcmp.gt.f32.partialorder %v1484, 0.0
      %vm1587 = vcmp.gt.f32.partialorder %v1489, 0.0
      %vm1588 = vcmp.gt.f32.partialorder %v1494, 0.0
      %vm1589 = vcmp.gt.f32.partialorder %v1499, 0.0
      %vm1590 = vcmp.gt.f32.partialorder %v1504, 0.0
      %vm1591 = vcmp.gt.f32.partialorder %v1509, 0.0
      %vm1592 = vcmp.gt.f32.partialorder %v1514, 0.0
      %vm1593 = vcmp.gt.f32.partialorder %v1519, 0.0
      %vm1594 = vcmp.gt.f32.partialorder %v1524, 0.0
      %vm1595 = vcmp.gt.f32.partialorder %v1529, 0.0
      %vm1596 = vcmp.gt.f32.partialorder %v1534, 0.0
      %vm1597 = vcmp.gt.f32.partialorder %v1539, 0.0
      %vm1598 = vcmp.gt.f32.partialorder %v1544, 0.0
      %vm1599 = vcmp.gt.f32.partialorder %v1549, 0.0
      %vm1600 = vcmp.gt.f32.partialorder %v1554, 0.0
      %vm1601 = vcmp.gt.f32.partialorder %v1559, 0.0
      %vm1602 = vcmp.gt.f32.partialorder %v1564, 0.0
      %vm1603 = vcmp.gt.f32.partialorder %v1569, 0.0
      %v1604 = vmul.f32 %v1414, 1.442695
      %v1605 = vpow.pop %v1604
      %v1606 = vmul.f32 %v1419, 1.442695
      %v1607 = vpow.pop %v1606
      %v1608 = vmul.f32 %v1424, 1.442695
      %v1609 = vpow.pop %v1608
      %v1610 = vmul.f32 %v1429, 1.442695
      %v1611 = vpow.pop %v1610
      %v1612 = vmul.f32 %v1434, 1.442695
      %v1613 = vpow.pop %v1612
      %v1614 = vmul.f32 %v1439, 1.442695
      %v1615 = vpow.pop %v1614
      %v1616 = vmul.f32 %v1444, 1.442695
      %v1617 = vpow.pop %v1616
      %v1618 = vmul.f32 %v1449, 1.442695
      %v1619 = vpow.pop %v1618
      %v1620 = vmul.f32 %v1454, 1.442695
      %v1621 = vpow.pop %v1620
      %v1622 = vmul.f32 %v1459, 1.442695
      %v1623 = vpow.pop %v1622
      %v1624 = vmul.f32 %v1464, 1.442695
      %v1625 = vpow.pop %v1624
      %v1626 = vmul.f32 %v1469, 1.442695
      %v1627 = vpow.pop %v1626
      %v1628 = vmul.f32 %v1474, 1.442695
      %v1629 = vpow.pop %v1628
      %v1630 = vmul.f32 %v1479, 1.442695
      %v1631 = vpow.pop %v1630
      %v1632 = vmul.f32 %v1484, 1.442695
      %v1633 = vpow.pop %v1632
      %v1634 = vmul.f32 %v1489, 1.442695
      %v1635 = vpow.pop %v1634
      %v1636 = vmul.f32 %v1494, 1.442695
      %v1637 = vpow.pop %v1636
      %v1638 = vmul.f32 %v1499, 1.442695
      %v1639 = vpow.pop %v1638
      %v1640 = vmul.f32 %v1504, 1.442695
      %v1641 = vpow.pop %v1640
      %v1642 = vmul.f32 %v1509, 1.442695
      %v1643 = vpow.pop %v1642
      %v1644 = vmul.f32 %v1514, 1.442695
      %v1645 = vpow.pop %v1644
      %v1646 = vmul.f32 %v1519, 1.442695
      %v1647 = vpow.pop %v1646
      %v1648 = vmul.f32 %v1524, 1.442695
      %v1649 = vpow.pop %v1648
      %v1650 = vmul.f32 %v1529, 1.442695
      %v1651 = vpow.pop %v1650
      %v1652 = vmul.f32 %v1534, 1.442695
      %v1653 = vpow.pop %v1652
      %v1654 = vmul.f32 %v1539, 1.442695
      %v1655 = vpow.pop %v1654
      %v1656 = vmul.f32 %v1544, 1.442695
      %v1657 = vpow.pop %v1656
      %v1658 = vmul.f32 %v1549, 1.442695
      %v1659 = vpow.pop %v1658
      %v1660 = vmul.f32 %v1554, 1.442695
      %v1661 = vpow.pop %v1660
      %v1662 = vmul.f32 %v1559, 1.442695
      %v1663 = vpow.pop %v1662
      %v1664 = vmul.f32 %v1564, 1.442695
      %v1665 = vpow.pop %v1664
      %v1666 = vmul.f32 %v1569, 1.442695
      %v1667 = vpow.pop %v1666
      %v1668 = vsub.f32 %v1605, 1.0
      %v1669 = vsub.f32 %v1607, 1.0
      %v1670 = vsub.f32 %v1609, 1.0
      %v1671 = vsub.f32 %v1611, 1.0
      %v1672 = vsub.f32 %v1613, 1.0
      %v1673 = vsub.f32 %v1615, 1.0
      %v1674 = vsub.f32 %v1617, 1.0
      %v1675 = vsub.f32 %v1619, 1.0
      %v1676 = vsub.f32 %v1621, 1.0
      %v1677 = vsub.f32 %v1623, 1.0
      %v1678 = vsub.f32 %v1625, 1.0
      %v1679 = vsub.f32 %v1627, 1.0
      %v1680 = vsub.f32 %v1629, 1.0
      %v1681 = vsub.f32 %v1631, 1.0
      %v1682 = vsub.f32 %v1633, 1.0
      %v1683 = vsub.f32 %v1635, 1.0
      %v1684 = vsub.f32 %v1637, 1.0
      %v1685 = vsub.f32 %v1639, 1.0
      %v1686 = vsub.f32 %v1641, 1.0
      %v1687 = vsub.f32 %v1643, 1.0
      %v1688 = vsub.f32 %v1645, 1.0
      %v1689 = vsub.f32 %v1647, 1.0
      %v1690 = vsub.f32 %v1649, 1.0
      %v1691 = vsub.f32 %v1651, 1.0
      %v1692 = vsub.f32 %v1653, 1.0
      %v1693 = vsub.f32 %v1655, 1.0
      %v1694 = vsub.f32 %v1657, 1.0
      %v1695 = vsub.f32 %v1659, 1.0
      %v1696 = vsub.f32 %v1661, 1.0
      %v1697 = vsub.f32 %v1663, 1.0
      %v1698 = vsub.f32 %v1665, 1.0
      %v1699 = vsub.f32 %v1667, 1.0
      %v1700 = vsel %vm1572, %v1414, %v1668
      %v1701 = vsel %vm1573, %v1419, %v1669
      %v1702 = vsel %vm1574, %v1424, %v1670
      %v1703 = vsel %vm1575, %v1429, %v1671
      %v1704 = vsel %vm1576, %v1434, %v1672
      %v1705 = vsel %vm1577, %v1439, %v1673
      %v1706 = vsel %vm1578, %v1444, %v1674
      %v1707 = vsel %vm1579, %v1449, %v1675
      %v1708 = vsel %vm1580, %v1454, %v1676
      %v1709 = vsel %vm1581, %v1459, %v1677
      %v1710 = vsel %vm1582, %v1464, %v1678
      %v1711 = vsel %vm1583, %v1469, %v1679
      %v1712 = vsel %vm1584, %v1474, %v1680
      %v1713 = vsel %vm1585, %v1479, %v1681
      %v1714 = vsel %vm1586, %v1484, %v1682
      %v1715 = vsel %vm1587, %v1489, %v1683
      %v1716 = vsel %vm1588, %v1494, %v1684
      %v1717 = vsel %vm1589, %v1499, %v1685
      %v1718 = vsel %vm1590, %v1504, %v1686
      %v1719 = vsel %vm1591, %v1509, %v1687
      %v1720 = vsel %vm1592, %v1514, %v1688
      %v1721 = vsel %vm1593, %v1519, %v1689
      %v1722 = vsel %vm1594, %v1524, %v1690
      %v1723 = vsel %vm1595, %v1529, %v1691
      %v1724 = vsel %vm1596, %v1534, %v1692
      %v1725 = vsel %vm1597, %v1539, %v1693
      %v1726 = vsel %vm1598, %v1544, %v1694
      %v1727 = vsel %vm1599, %v1549, %v1695
      %v1728 = vsel %vm1600, %v1554, %v1696
      %v1729 = vsel %vm1601, %v1559, %v1697
      %v1730 = vsel %vm1602, %v1564, %v1698
      %v1731 = vsel %vm1603, %v1569, %v1699
      %v1732 = vld [vmem:[%s1 + $0x1e0] sm:$0xff]
      %v1733 = vld [vmem:[%s1 + $0x1e8] sm:$0xff]
      %v1734 = vld [vmem:[%s1 + $0x1f0] sm:$0xff]
      %v1735 = vld [vmem:[%s1 + $0x1f8] sm:$0xff]
      %v1736 = vld [vmem:[%s1 + $0x200] sm:$0xff]
      %v1737 = vld [vmem:[%s1 + $0x208] sm:$0xff]
      %v1738 = vld [vmem:[%s1 + $0x210] sm:$0xff]
      %v1739 = vld [vmem:[%s1 + $0x218] sm:$0xff]
      %v1740 = vld [vmem:[%s1 + $0x220] sm:$0xff]
      %v1741 = vld [vmem:[%s1 + $0x228] sm:$0xff]
      %v1742 = vld [vmem:[%s1 + $0x230] sm:$0xff]
      %v1743 = vld [vmem:[%s1 + $0x238] sm:$0xff]
      %v1744 = vld [vmem:[%s1 + $0x240] sm:$0xff]
      %v1745 = vld [vmem:[%s1 + $0x248] sm:$0xff]
      %v1746 = vld [vmem:[%s1 + $0x250] sm:$0xff]
      %v1747 = vld [vmem:[%s1 + $0x258] sm:$0xff]
      %v1748 = vld [vmem:[%s1 + $0x260] sm:$0x1]
      %v1749 = vlaneseq
      %v1750 = vshrl.u32 %v1749, 7
      %v1751 = vsub.s32 0, %v1750
      %v1752 = vrot.slane %v1748, %v1751
      %1753 = vmatprep.subr.mxu0 0.0
      %1754 = vmatpush1.msra.mxu0 %v1732
      %1755 = vmatprep.subr.mxu0 0.0
      %1756 = vmatpush1.msra.mxu0 %v1733
      %1757 = vmatprep.subr.mxu0 0.0
      %1758 = vmatpush1.msra.mxu0 %v1734
      %1759 = vmatprep.subr.mxu0 0.0
      %1760 = vmatpush1.msra.mxu0 %v1735
      %1761 = vmatprep.subr.mxu0 0.0
      %1762 = vmatpush1.msra.mxu0 %v1736
      %1763 = vmatprep.subr.mxu0 0.0
      %1764 = vmatpush1.msra.mxu0 %v1737
      %1765 = vmatprep.subr.mxu0 0.0
      %1766 = vmatpush1.msra.mxu0 %v1738
      %1767 = vmatprep.subr.mxu0 0.0
      %1768 = vmatpush1.msra.mxu0 %v1739
      %1769 = vmatprep.subr.mxu0 0.0
      %1770 = vmatpush1.msra.mxu0 %v1740
      %1771 = vmatprep.subr.mxu0 0.0
      %1772 = vmatpush1.msra.mxu0 %v1741
      %1773 = vmatprep.subr.mxu0 0.0
      %1774 = vmatpush1.msra.mxu0 %v1742
      %1775 = vmatprep.subr.mxu0 0.0
      %1776 = vmatpush1.msra.mxu0 %v1743
      %1777 = vmatprep.subr.mxu0 0.0
      %1778 = vmatpush1.msra.mxu0 %v1744
      %1779 = vmatprep.subr.mxu0 0.0
      %1780 = vmatpush1.msra.mxu0 %v1745
      %1781 = vmatprep.subr.mxu0 0.0
      %1782 = vmatpush1.msra.mxu0 %v1746
      %1783 = vmatprep.subr.mxu0 0.0
      %1784 = vmatpush1.msra.mxu0 %v1747
      %1785 = vmatprep.subr.mxu0 0.0
      %1786 = vmatpush1.msra.mxu0 0.0
      %1787 = vmatprep.subr.mxu0 0.0
      %1788 = vmatpush1.msra.mxu0 0.0
      %1789 = vmatprep.subr.mxu0 0.0
      %1790 = vmatpush1.msra.mxu0 0.0
      %1791 = vmatprep.subr.mxu0 0.0
      %1792 = vmatpush1.msra.mxu0 0.0
      %1793 = vmatprep.subr.mxu0 0.0
      %1794 = vmatpush1.msra.mxu0 0.0
      %1795 = vmatprep.subr.mxu0 0.0
      %1796 = vmatpush1.msra.mxu0 0.0
      %1797 = vmatprep.subr.mxu0 0.0
      %1798 = vmatpush1.msra.mxu0 0.0
      %1799 = vmatprep.subr.mxu0 0.0
      %1800 = vmatpush1.msra.mxu0 0.0
      %1801 = vmatprep.subr.mxu0 0.0
      %1802 = vmatpush1.msra.mxu0 0.0
      %1803 = vmatprep.subr.mxu0 0.0
      %1804 = vmatpush1.msra.mxu0 0.0
      %1805 = vmatprep.subr.mxu0 0.0
      %1806 = vmatpush1.msra.mxu0 0.0
      %1807 = vmatprep.subr.mxu0 0.0
      %1808 = vmatpush1.msra.mxu0 0.0
      %1809 = vmatprep.subr.mxu0 0.0
      %1810 = vmatpush1.msra.mxu0 0.0
      %1811 = vmatprep.subr.mxu0 0.0
      %1812 = vmatpush1.msra.mxu0 0.0
      %1813 = vmatprep.subr.mxu0 0.0
      %1814 = vmatpush1.msra.mxu0 0.0
      %1815 = vmatprep.subr.mxu0 0.0
      %1816 = vmatpush1.msra.mxu0 0.0
      %1817 = vmatprep.mubr.f32.mxu0 0.0
      %1818 = vmatmul.mubr.f32.gmra.mrb[0].mxu0 %v1700
      %v1819 = vpop.f32.mrb[0].mxu0
      %v1820 = vadd.f32 %v1752, %v1819
      %v1821 = vpop.f32.mrb[0].mxu0
      %1822 = vmatprep.mubr.f32.mxu0 0.0
      %1823 = vmatmul.mubr.f32.gmra.mrb[0].mxu0 %v1701
      %v1824 = vpop.f32.mrb[0].mxu0
      %v1825 = vadd.f32 %v1752, %v1824
      %v1826 = vpop.f32.mrb[0].mxu0
      %1827 = vmatprep.mubr.f32.mxu0 0.0
      %1828 = vmatmul.mubr.f32.gmra.mrb[0].mxu0 %v1702
      %v1829 = vpop.f32.mrb[0].mxu0
      %v1830 = vadd.f32 %v1752, %v1829
      %v1831 = vpop.f32.mrb[0].mxu0
      %1832 = vmatprep.mubr.f32.mxu0 0.0
      %1833 = vmatmul.mubr.f32.gmra.mrb[0].mxu0 %v1703
      %v1834 = vpop.f32.mrb[0].mxu0
      %v1835 = vadd.f32 %v1752, %v1834
      %v1836 = vpop.f32.mrb[0].mxu0
      %1837 = vmatprep.mubr.f32.mxu0 0.0
      %1838 = vmatmul.mubr.f32.gmra.mrb[0].mxu0 %v1704
      %v1839 = vpop.f32.mrb[0].mxu0
      %v1840 = vadd.f32 %v1752, %v1839
      %v1841 = vpop.f32.mrb[0].mxu0
      %1842 = vmatprep.mubr.f32.mxu0 0.0
      %1843 = vmatmul.mubr.f32.gmra.mrb[0].mxu0 %v1705
      %v1844 = vpop.f32.mrb[0].mxu0
      %v1845 = vadd.f32 %v1752, %v1844
      %v1846 = vpop.f32.mrb[0].mxu0
      %1847 = vmatprep.mubr.f32.mxu0 0.0
      %1848 = vmatmul.mubr.f32.gmra.mrb[0].mxu0 %v1706
      %v1849 = vpop.f32.mrb[0].mxu0
      %v1850 = vadd.f32 %v1752, %v1849
      %v1851 = vpop.f32.mrb[0].mxu0
      %1852 = vmatprep.mubr.f32.mxu0 0.0
      %1853 = vmatmul.mubr.f32.gmra.mrb[0].mxu0 %v1707
      %v1854 = vpop.f32.mrb[0].mxu0
      %v1855 = vadd.f32 %v1752, %v1854
      %v1856 = vpop.f32.mrb[0].mxu0
      %1857 = vmatprep.mubr.f32.mxu0 0.0
      %1858 = vmatmul.mubr.f32.gmra.mrb[0].mxu0 %v1708
      %v1859 = vpop.f32.mrb[0].mxu0
      %v1860 = vadd.f32 %v1752, %v1859
      %v1861 = vpop.f32.mrb[0].mxu0
      %1862 = vmatprep.mubr.f32.mxu0 0.0
      %1863 = vmatmul.mubr.f32.gmra.mrb[0].mxu0 %v1709
      %v1864 = vpop.f32.mrb[0].mxu0
      %v1865 = vadd.f32 %v1752, %v1864
      %v1866 = vpop.f32.mrb[0].mxu0
      %1867 = vmatprep.mubr.f32.mxu0 0.0
      %1868 = vmatmul.mubr.f32.gmra.mrb[0].mxu0 %v1710
      %v1869 = vpop.f32.mrb[0].mxu0
      %v1870 = vadd.f32 %v1752, %v1869
      %v1871 = vpop.f32.mrb[0].mxu0
      %1872 = vmatprep.mubr.f32.mxu0 0.0
      %1873 = vmatmul.mubr.f32.gmra.mrb[0].mxu0 %v1711
      %v1874 = vpop.f32.mrb[0].mxu0
      %v1875 = vadd.f32 %v1752, %v1874
      %v1876 = vpop.f32.mrb[0].mxu0
      %1877 = vmatprep.mubr.f32.mxu0 0.0
      %1878 = vmatmul.mubr.f32.gmra.mrb[0].mxu0 %v1712
      %v1879 = vpop.f32.mrb[0].mxu0
      %v1880 = vadd.f32 %v1752, %v1879
      %v1881 = vpop.f32.mrb[0].mxu0
      %1882 = vmatprep.mubr.f32.mxu0 0.0
      %1883 = vmatmul.mubr.f32.gmra.mrb[0].mxu0 %v1713
      %v1884 = vpop.f32.mrb[0].mxu0
      %v1885 = vadd.f32 %v1752, %v1884
      %v1886 = vpop.f32.mrb[0].mxu0
      %1887 = vmatprep.mubr.f32.mxu0 0.0
      %1888 = vmatmul.mubr.f32.gmra.mrb[0].mxu0 %v1714
      %v1889 = vpop.f32.mrb[0].mxu0
      %v1890 = vadd.f32 %v1752, %v1889
      %v1891 = vpop.f32.mrb[0].mxu0
      %1892 = vmatprep.mubr.f32.mxu0 0.0
      %1893 = vmatmul.mubr.f32.gmra.mrb[0].mxu0 %v1715
      %v1894 = vpop.f32.mrb[0].mxu0
      %v1895 = vadd.f32 %v1752, %v1894
      %v1896 = vpop.f32.mrb[0].mxu0
      %1897 = vmatprep.mubr.f32.mxu0 0.0
      %1898 = vmatmul.mubr.f32.gmra.mrb[0].mxu0 %v1716
      %v1899 = vpop.f32.mrb[0].mxu0
      %v1900 = vadd.f32 %v1752, %v1899
      %v1901 = vpop.f32.mrb[0].mxu0
      %1902 = vmatprep.mubr.f32.mxu0 0.0
      %1903 = vmatmul.mubr.f32.gmra.mrb[0].mxu0 %v1717
      %v1904 = vpop.f32.mrb[0].mxu0
      %v1905 = vadd.f32 %v1752, %v1904
      %v1906 = vpop.f32.mrb[0].mxu0
      %1907 = vmatprep.mubr.f32.mxu0 0.0
      %1908 = vmatmul.mubr.f32.gmra.mrb[0].mxu0 %v1718
      %v1909 = vpop.f32.mrb[0].mxu0
      %v1910 = vadd.f32 %v1752, %v1909
      %v1911 = vpop.f32.mrb[0].mxu0
      %1912 = vmatprep.mubr.f32.mxu0 0.0
      %1913 = vmatmul.mubr.f32.gmra.mrb[0].mxu0 %v1719
      %v1914 = vpop.f32.mrb[0].mxu0
      %v1915 = vadd.f32 %v1752, %v1914
      %v1916 = vpop.f32.mrb[0].mxu0
      %1917 = vmatprep.mubr.f32.mxu0 0.0
      %1918 = vmatmul.mubr.f32.gmra.mrb[0].mxu0 %v1720
      %v1919 = vpop.f32.mrb[0].mxu0
      %v1920 = vadd.f32 %v1752, %v1919
      %v1921 = vpop.f32.mrb[0].mxu0
      %1922 = vmatprep.mubr.f32.mxu0 0.0
      %1923 = vmatmul.mubr.f32.gmra.mrb[0].mxu0 %v1721
      %v1924 = vpop.f32.mrb[0].mxu0
      %v1925 = vadd.f32 %v1752, %v1924
      %v1926 = vpop.f32.mrb[0].mxu0
      %1927 = vmatprep.mubr.f32.mxu0 0.0
      %1928 = vmatmul.mubr.f32.gmra.mrb[0].mxu0 %v1722
      %v1929 = vpop.f32.mrb[0].mxu0
      %v1930 = vadd.f32 %v1752, %v1929
      %v1931 = vpop.f32.mrb[0].mxu0
      %1932 = vmatprep.mubr.f32.mxu0 0.0
      %1933 = vmatmul.mubr.f32.gmra.mrb[0].mxu0 %v1723
      %v1934 = vpop.f32.mrb[0].mxu0
      %v1935 = vadd.f32 %v1752, %v1934
      %v1936 = vpop.f32.mrb[0].mxu0
      %1937 = vmatprep.mubr.f32.mxu0 0.0
      %1938 = vmatmul.mubr.f32.gmra.mrb[0].mxu0 %v1724
      %v1939 = vpop.f32.mrb[0].mxu0
      %v1940 = vadd.f32 %v1752, %v1939
      %v1941 = vpop.f32.mrb[0].mxu0
      %1942 = vmatprep.mubr.f32.mxu0 0.0
      %1943 = vmatmul.mubr.f32.gmra.mrb[0].mxu0 %v1725
      %v1944 = vpop.f32.mrb[0].mxu0
      %v1945 = vadd.f32 %v1752, %v1944
      %v1946 = vpop.f32.mrb[0].mxu0
      %1947 = vmatprep.mubr.f32.mxu0 0.0
      %1948 = vmatmul.mubr.f32.gmra.mrb[0].mxu0 %v1726
      %v1949 = vpop.f32.mrb[0].mxu0
      %v1950 = vadd.f32 %v1752, %v1949
      %v1951 = vpop.f32.mrb[0].mxu0
      %1952 = vmatprep.mubr.f32.mxu0 0.0
      %1953 = vmatmul.mubr.f32.gmra.mrb[0].mxu0 %v1727
      %v1954 = vpop.f32.mrb[0].mxu0
      %v1955 = vadd.f32 %v1752, %v1954
      %v1956 = vpop.f32.mrb[0].mxu0
      %1957 = vmatprep.mubr.f32.mxu0 0.0
      %1958 = vmatmul.mubr.f32.gmra.mrb[0].mxu0 %v1728
      %v1959 = vpop.f32.mrb[0].mxu0
      %v1960 = vadd.f32 %v1752, %v1959
      %v1961 = vpop.f32.mrb[0].mxu0
      %1962 = vmatprep.mubr.f32.mxu0 0.0
      %1963 = vmatmul.mubr.f32.gmra.mrb[0].mxu0 %v1729
      %v1964 = vpop.f32.mrb[0].mxu0
      %v1965 = vadd.f32 %v1752, %v1964
      %v1966 = vpop.f32.mrb[0].mxu0
      %1967 = vmatprep.mubr.f32.mxu0 0.0
      %1968 = vmatmul.mubr.f32.gmra.mrb[0].mxu0 %v1730
      %v1969 = vpop.f32.mrb[0].mxu0
      %v1970 = vadd.f32 %v1752, %v1969
      %v1971 = vpop.f32.mrb[0].mxu0
      %1972 = vmatprep.mubr.f32.mxu0 0.0
      %1973 = vmatmul.mubr.f32.gmra.mrb[0].mxu0 %v1731
      %v1974 = vpop.f32.mrb[0].mxu0
      %v1975 = vadd.f32 %v1752, %v1974
      %v1976 = vpop.f32.mrb[0].mxu0
      %1977 = vdwg.mxu0
      %vm1978 = vcmp.gt.f32.partialorder %v1820, 0.0
      %vm1979 = vcmp.gt.f32.partialorder %v1825, 0.0
      %vm1980 = vcmp.gt.f32.partialorder %v1830, 0.0
      %vm1981 = vcmp.gt.f32.partialorder %v1835, 0.0
      %vm1982 = vcmp.gt.f32.partialorder %v1840, 0.0
      %vm1983 = vcmp.gt.f32.partialorder %v1845, 0.0
      %vm1984 = vcmp.gt.f32.partialorder %v1850, 0.0
      %vm1985 = vcmp.gt.f32.partialorder %v1855, 0.0
      %vm1986 = vcmp.gt.f32.partialorder %v1860, 0.0
      %vm1987 = vcmp.gt.f32.partialorder %v1865, 0.0
      %vm1988 = vcmp.gt.f32.partialorder %v1870, 0.0
      %vm1989 = vcmp.gt.f32.partialorder %v1875, 0.0
      %vm1990 = vcmp.gt.f32.partialorder %v1880, 0.0
      %vm1991 = vcmp.gt.f32.partialorder %v1885, 0.0
      %vm1992 = vcmp.gt.f32.partialorder %v1890, 0.0
      %vm1993 = vcmp.gt.f32.partialorder %v1895, 0.0
      %vm1994 = vcmp.gt.f32.partialorder %v1900, 0.0
      %vm1995 = vcmp.gt.f32.partialorder %v1905, 0.0
      %vm1996 = vcmp.gt.f32.partialorder %v1910, 0.0
      %vm1997 = vcmp.gt.f32.partialorder %v1915, 0.0
      %vm1998 = vcmp.gt.f32.partialorder %v1920, 0.0
      %vm1999 = vcmp.gt.f32.partialorder %v1925, 0.0
      %vm2000 = vcmp.gt.f32.partialorder %v1930, 0.0
      %vm2001 = vcmp.gt.f32.partialorder %v1935, 0.0
      %vm2002 = vcmp.gt.f32.partialorder %v1940, 0.0
      %vm2003 = vcmp.gt.f32.partialorder %v1945, 0.0
      %vm2004 = vcmp.gt.f32.partialorder %v1950, 0.0
      %vm2005 = vcmp.gt.f32.partialorder %v1955, 0.0
      %vm2006 = vcmp.gt.f32.partialorder %v1960, 0.0
      %vm2007 = vcmp.gt.f32.partialorder %v1965, 0.0
      %vm2008 = vcmp.gt.f32.partialorder %v1970, 0.0
      %vm2009 = vcmp.gt.f32.partialorder %v1975, 0.0
      %v2010 = vmul.f32 %v1820, 1.442695
      %v2011 = vpow.pop %v2010
      %v2012 = vmul.f32 %v1825, 1.442695
      %v2013 = vpow.pop %v2012
      %v2014 = vmul.f32 %v1830, 1.442695
      %v2015 = vpow.pop %v2014
      %v2016 = vmul.f32 %v1835, 1.442695
      %v2017 = vpow.pop %v2016
      %v2018 = vmul.f32 %v1840, 1.442695
      %v2019 = vpow.pop %v2018
      %v2020 = vmul.f32 %v1845, 1.442695
      %v2021 = vpow.pop %v2020
      %v2022 = vmul.f32 %v1850, 1.442695
      %v2023 = vpow.pop %v2022
      %v2024 = vmul.f32 %v1855, 1.442695
      %v2025 = vpow.pop %v2024
      %v2026 = vmul.f32 %v1860, 1.442695
      %v2027 = vpow.pop %v2026
      %v2028 = vmul.f32 %v1865, 1.442695
      %v2029 = vpow.pop %v2028
      %v2030 = vmul.f32 %v1870, 1.442695
      %v2031 = vpow.pop %v2030
      %v2032 = vmul.f32 %v1875, 1.442695
      %v2033 = vpow.pop %v2032
      %v2034 = vmul.f32 %v1880, 1.442695
      %v2035 = vpow.pop %v2034
      %v2036 = vmul.f32 %v1885, 1.442695
      %v2037 = vpow.pop %v2036
      %v2038 = vmul.f32 %v1890, 1.442695
      %v2039 = vpow.pop %v2038
      %v2040 = vmul.f32 %v1895, 1.442695
      %v2041 = vpow.pop %v2040
      %v2042 = vmul.f32 %v1900, 1.442695
      %v2043 = vpow.pop %v2042
      %v2044 = vmul.f32 %v1905, 1.442695
      %v2045 = vpow.pop %v2044
      %v2046 = vmul.f32 %v1910, 1.442695
      %v2047 = vpow.pop %v2046
      %v2048 = vmul.f32 %v1915, 1.442695
      %v2049 = vpow.pop %v2048
      %v2050 = vmul.f32 %v1920, 1.442695
      %v2051 = vpow.pop %v2050
      %v2052 = vmul.f32 %v1925, 1.442695
      %v2053 = vpow.pop %v2052
      %v2054 = vmul.f32 %v1930, 1.442695
      %v2055 = vpow.pop %v2054
      %v2056 = vmul.f32 %v1935, 1.442695
      %v2057 = vpow.pop %v2056
      %v2058 = vmul.f32 %v1940, 1.442695
      %v2059 = vpow.pop %v2058
      %v2060 = vmul.f32 %v1945, 1.442695
      %v2061 = vpow.pop %v2060
      %v2062 = vmul.f32 %v1950, 1.442695
      %v2063 = vpow.pop %v2062
      %v2064 = vmul.f32 %v1955, 1.442695
      %v2065 = vpow.pop %v2064
      %v2066 = vmul.f32 %v1960, 1.442695
      %v2067 = vpow.pop %v2066
      %v2068 = vmul.f32 %v1965, 1.442695
      %v2069 = vpow.pop %v2068
      %v2070 = vmul.f32 %v1970, 1.442695
      %v2071 = vpow.pop %v2070
      %v2072 = vmul.f32 %v1975, 1.442695
      %v2073 = vpow.pop %v2072
      %v2074 = vsub.f32 %v2011, 1.0
      %v2075 = vsub.f32 %v2013, 1.0
      %v2076 = vsub.f32 %v2015, 1.0
      %v2077 = vsub.f32 %v2017, 1.0
      %v2078 = vsub.f32 %v2019, 1.0
      %v2079 = vsub.f32 %v2021, 1.0
      %v2080 = vsub.f32 %v2023, 1.0
      %v2081 = vsub.f32 %v2025, 1.0
      %v2082 = vsub.f32 %v2027, 1.0
      %v2083 = vsub.f32 %v2029, 1.0
      %v2084 = vsub.f32 %v2031, 1.0
      %v2085 = vsub.f32 %v2033, 1.0
      %v2086 = vsub.f32 %v2035, 1.0
      %v2087 = vsub.f32 %v2037, 1.0
      %v2088 = vsub.f32 %v2039, 1.0
      %v2089 = vsub.f32 %v2041, 1.0
      %v2090 = vsub.f32 %v2043, 1.0
      %v2091 = vsub.f32 %v2045, 1.0
      %v2092 = vsub.f32 %v2047, 1.0
      %v2093 = vsub.f32 %v2049, 1.0
      %v2094 = vsub.f32 %v2051, 1.0
      %v2095 = vsub.f32 %v2053, 1.0
      %v2096 = vsub.f32 %v2055, 1.0
      %v2097 = vsub.f32 %v2057, 1.0
      %v2098 = vsub.f32 %v2059, 1.0
      %v2099 = vsub.f32 %v2061, 1.0
      %v2100 = vsub.f32 %v2063, 1.0
      %v2101 = vsub.f32 %v2065, 1.0
      %v2102 = vsub.f32 %v2067, 1.0
      %v2103 = vsub.f32 %v2069, 1.0
      %v2104 = vsub.f32 %v2071, 1.0
      %v2105 = vsub.f32 %v2073, 1.0
      %v2106 = vsel %vm1978, %v1820, %v2074
      %v2107 = vsel %vm1979, %v1825, %v2075
      %v2108 = vsel %vm1980, %v1830, %v2076
      %v2109 = vsel %vm1981, %v1835, %v2077
      %v2110 = vsel %vm1982, %v1840, %v2078
      %v2111 = vsel %vm1983, %v1845, %v2079
      %v2112 = vsel %vm1984, %v1850, %v2080
      %v2113 = vsel %vm1985, %v1855, %v2081
      %v2114 = vsel %vm1986, %v1860, %v2082
      %v2115 = vsel %vm1987, %v1865, %v2083
      %v2116 = vsel %vm1988, %v1870, %v2084
      %v2117 = vsel %vm1989, %v1875, %v2085
      %v2118 = vsel %vm1990, %v1880, %v2086
      %v2119 = vsel %vm1991, %v1885, %v2087
      %v2120 = vsel %vm1992, %v1890, %v2088
      %v2121 = vsel %vm1993, %v1895, %v2089
      %v2122 = vsel %vm1994, %v1900, %v2090
      %v2123 = vsel %vm1995, %v1905, %v2091
      %v2124 = vsel %vm1996, %v1910, %v2092
      %v2125 = vsel %vm1997, %v1915, %v2093
      %v2126 = vsel %vm1998, %v1920, %v2094
      %v2127 = vsel %vm1999, %v1925, %v2095
      %v2128 = vsel %vm2000, %v1930, %v2096
      %v2129 = vsel %vm2001, %v1935, %v2097
      %v2130 = vsel %vm2002, %v1940, %v2098
      %v2131 = vsel %vm2003, %v1945, %v2099
      %v2132 = vsel %vm2004, %v1950, %v2100
      %v2133 = vsel %vm2005, %v1955, %v2101
      %v2134 = vsel %vm2006, %v1960, %v2102
      %v2135 = vsel %vm2007, %v1965, %v2103
      %v2136 = vsel %vm2008, %v1970, %v2104
      %v2137 = vsel %vm2009, %v1975, %v2105
      %v2138 = vld [vmem:[%s1 + $0x268] sm:$0xff]
      %v2139 = vld [vmem:[%s1 + $0x270] sm:$0xff]
      %v2140 = vld [vmem:[%s1 + $0x278] sm:$0xff]
      %v2141 = vld [vmem:[%s1 + $0x280] sm:$0xff]
      %v2142 = vld [vmem:[%s1 + $0x288] sm:$0xff]
      %v2143 = vld [vmem:[%s1 + $0x290] sm:$0xff]
      %v2144 = vld [vmem:[%s1 + $0x298] sm:$0xff]
      %v2145 = vld [vmem:[%s1 + $0x2a0] sm:$0xff]
      %v2146 = vld [vmem:[%s1 + $0x2a8] sm:$0xff]
      %v2147 = vld [vmem:[%s1 + $0x2b0] sm:$0xff]
      %v2148 = vld [vmem:[%s1 + $0x2b8] sm:$0xff]
      %v2149 = vld [vmem:[%s1 + $0x2c0] sm:$0xff]
      %v2150 = vld [vmem:[%s1 + $0x2c8] sm:$0xff]
      %v2151 = vld [vmem:[%s1 + $0x2d0] sm:$0xff]
      %v2152 = vld [vmem:[%s1 + $0x2d8] sm:$0xff]
      %v2153 = vld [vmem:[%s1 + $0x2e0] sm:$0xff]
      %v2154 = vld [vmem:[%s1 + $0x2e8] sm:$0x1]
      %v2155 = vlaneseq
      %v2156 = vshrl.u32 %v2155, 7
      %v2157 = vsub.s32 0, %v2156
      %v2158 = vrot.slane %v2154, %v2157
      %2159 = vmatprep.subr.mxu0 0.0
      %2160 = vmatpush1.msra.mxu0 %v2138
      %2161 = vmatprep.subr.mxu0 0.0
      %2162 = vmatpush1.msra.mxu0 %v2139
      %2163 = vmatprep.subr.mxu0 0.0
      %2164 = vmatpush1.msra.mxu0 %v2140
      %2165 = vmatprep.subr.mxu0 0.0
      %2166 = vmatpush1.msra.mxu0 %v2141
      %2167 = vmatprep.subr.mxu0 0.0
      %2168 = vmatpush1.msra.mxu0 %v2142
      %2169 = vmatprep.subr.mxu0 0.0
      %2170 = vmatpush1.msra.mxu0 %v2143
      %2171 = vmatprep.subr.mxu0 0.0
      %2172 = vmatpush1.msra.mxu0 %v2144
      %2173 = vmatprep.subr.mxu0 0.0
      %2174 = vmatpush1.msra.mxu0 %v2145
      %2175 = vmatprep.subr.mxu0 0.0
      %2176 = vmatpush1.msra.mxu0 %v2146
      %2177 = vmatprep.subr.mxu0 0.0
      %2178 = vmatpush1.msra.mxu0 %v2147
      %2179 = vmatprep.subr.mxu0 0.0
      %2180 = vmatpush1.msra.mxu0 %v2148
      %2181 = vmatprep.subr.mxu0 0.0
      %2182 = vmatpush1.msra.mxu0 %v2149
      %2183 = vmatprep.subr.mxu0 0.0
      %2184 = vmatpush1.msra.mxu0 %v2150
      %2185 = vmatprep.subr.mxu0 0.0
      %2186 = vmatpush1.msra.mxu0 %v2151
      %2187 = vmatprep.subr.mxu0 0.0
      %2188 = vmatpush1.msra.mxu0 %v2152
      %2189 = vmatprep.subr.mxu0 0.0
      %2190 = vmatpush1.msra.mxu0 %v2153
      %2191 = vmatprep.subr.mxu0 0.0
      %2192 = vmatpush1.msra.mxu0 0.0
      %2193 = vmatprep.subr.mxu0 0.0
      %2194 = vmatpush1.msra.mxu0 0.0
      %2195 = vmatprep.subr.mxu0 0.0
      %2196 = vmatpush1.msra.mxu0 0.0
      %2197 = vmatprep.subr.mxu0 0.0
      %2198 = vmatpush1.msra.mxu0 0.0
      %2199 = vmatprep.subr.mxu0 0.0
      %2200 = vmatpush1.msra.mxu0 0.0
      %2201 = vmatprep.subr.mxu0 0.0
      %2202 = vmatpush1.msra.mxu0 0.0
      %2203 = vmatprep.subr.mxu0 0.0
      %2204 = vmatpush1.msra.mxu0 0.0
      %2205 = vmatprep.subr.mxu0 0.0
      %2206 = vmatpush1.msra.mxu0 0.0
      %2207 = vmatprep.subr.mxu0 0.0
      %2208 = vmatpush1.msra.mxu0 0.0
      %2209 = vmatprep.subr.mxu0 0.0
      %2210 = vmatpush1.msra.mxu0 0.0
      %2211 = vmatprep.subr.mxu0 0.0
      %2212 = vmatpush1.msra.mxu0 0.0
      %2213 = vmatprep.subr.mxu0 0.0
      %2214 = vmatpush1.msra.mxu0 0.0
      %2215 = vmatprep.subr.mxu0 0.0
      %2216 = vmatpush1.msra.mxu0 0.0
      %2217 = vmatprep.subr.mxu0 0.0
      %2218 = vmatpush1.msra.mxu0 0.0
      %2219 = vmatprep.subr.mxu0 0.0
      %2220 = vmatpush1.msra.mxu0 0.0
      %2221 = vmatprep.subr.mxu0 0.0
      %2222 = vmatpush1.msra.mxu0 0.0
      %2223 = vmatprep.mubr.f32.mxu0 0.0
      %2224 = vmatmul.mubr.f32.gmra.mrb[0].mxu0 %v2106
      %v2225 = vpop.f32.mrb[0].mxu0
      %v2226 = vadd.f32 %v2158, %v2225
      %v2227 = vpop.f32.mrb[0].mxu0
      %2228 = vmatprep.mubr.f32.mxu0 0.0
      %2229 = vmatmul.mubr.f32.gmra.mrb[0].mxu0 %v2107
      %v2230 = vpop.f32.mrb[0].mxu0
      %v2231 = vadd.f32 %v2158, %v2230
      %v2232 = vpop.f32.mrb[0].mxu0
      %2233 = vmatprep.mubr.f32.mxu0 0.0
      %2234 = vmatmul.mubr.f32.gmra.mrb[0].mxu0 %v2108
      %v2235 = vpop.f32.mrb[0].mxu0
      %v2236 = vadd.f32 %v2158, %v2235
      %v2237 = vpop.f32.mrb[0].mxu0
      %2238 = vmatprep.mubr.f32.mxu0 0.0
      %2239 = vmatmul.mubr.f32.gmra.mrb[0].mxu0 %v2109
      %v2240 = vpop.f32.mrb[0].mxu0
      %v2241 = vadd.f32 %v2158, %v2240
      %v2242 = vpop.f32.mrb[0].mxu0
      %2243 = vmatprep.mubr.f32.mxu0 0.0
      %2244 = vmatmul.mubr.f32.gmra.mrb[0].mxu0 %v2110
      %v2245 = vpop.f32.mrb[0].mxu0
      %v2246 = vadd.f32 %v2158, %v2245
      %v2247 = vpop.f32.mrb[0].mxu0
      %2248 = vmatprep.mubr.f32.mxu0 0.0
      %2249 = vmatmul.mubr.f32.gmra.mrb[0].mxu0 %v2111
      %v2250 = vpop.f32.mrb[0].mxu0
      %v2251 = vadd.f32 %v2158, %v2250
      %v2252 = vpop.f32.mrb[0].mxu0
      %2253 = vmatprep.mubr.f32.mxu0 0.0
      %2254 = vmatmul.mubr.f32.gmra.mrb[0].mxu0 %v2112
      %v2255 = vpop.f32.mrb[0].mxu0
      %v2256 = vadd.f32 %v2158, %v2255
      %v2257 = vpop.f32.mrb[0].mxu0
      %2258 = vmatprep.mubr.f32.mxu0 0.0
      %2259 = vmatmul.mubr.f32.gmra.mrb[0].mxu0 %v2113
      %v2260 = vpop.f32.mrb[0].mxu0
      %v2261 = vadd.f32 %v2158, %v2260
      %v2262 = vpop.f32.mrb[0].mxu0
      %2263 = vmatprep.mubr.f32.mxu0 0.0
      %2264 = vmatmul.mubr.f32.gmra.mrb[0].mxu0 %v2114
      %v2265 = vpop.f32.mrb[0].mxu0
      %v2266 = vadd.f32 %v2158, %v2265
      %v2267 = vpop.f32.mrb[0].mxu0
      %2268 = vmatprep.mubr.f32.mxu0 0.0
      %2269 = vmatmul.mubr.f32.gmra.mrb[0].mxu0 %v2115
      %v2270 = vpop.f32.mrb[0].mxu0
      %v2271 = vadd.f32 %v2158, %v2270
      %v2272 = vpop.f32.mrb[0].mxu0
      %2273 = vmatprep.mubr.f32.mxu0 0.0
      %2274 = vmatmul.mubr.f32.gmra.mrb[0].mxu0 %v2116
      %v2275 = vpop.f32.mrb[0].mxu0
      %v2276 = vadd.f32 %v2158, %v2275
      %v2277 = vpop.f32.mrb[0].mxu0
      %2278 = vmatprep.mubr.f32.mxu0 0.0
      %2279 = vmatmul.mubr.f32.gmra.mrb[0].mxu0 %v2117
      %v2280 = vpop.f32.mrb[0].mxu0
      %v2281 = vadd.f32 %v2158, %v2280
      %v2282 = vpop.f32.mrb[0].mxu0
      %2283 = vmatprep.mubr.f32.mxu0 0.0
      %2284 = vmatmul.mubr.f32.gmra.mrb[0].mxu0 %v2118
      %v2285 = vpop.f32.mrb[0].mxu0
      %v2286 = vadd.f32 %v2158, %v2285
      %v2287 = vpop.f32.mrb[0].mxu0
      %2288 = vmatprep.mubr.f32.mxu0 0.0
      %2289 = vmatmul.mubr.f32.gmra.mrb[0].mxu0 %v2119
      %v2290 = vpop.f32.mrb[0].mxu0
      %v2291 = vadd.f32 %v2158, %v2290
      %v2292 = vpop.f32.mrb[0].mxu0
      %2293 = vmatprep.mubr.f32.mxu0 0.0
      %2294 = vmatmul.mubr.f32.gmra.mrb[0].mxu0 %v2120
      %v2295 = vpop.f32.mrb[0].mxu0
      %v2296 = vadd.f32 %v2158, %v2295
      %v2297 = vpop.f32.mrb[0].mxu0
      %2298 = vmatprep.mubr.f32.mxu0 0.0
      %2299 = vmatmul.mubr.f32.gmra.mrb[0].mxu0 %v2121
      %v2300 = vpop.f32.mrb[0].mxu0
      %v2301 = vadd.f32 %v2158, %v2300
      %v2302 = vpop.f32.mrb[0].mxu0
      %2303 = vmatprep.mubr.f32.mxu0 0.0
      %2304 = vmatmul.mubr.f32.gmra.mrb[0].mxu0 %v2122
      %v2305 = vpop.f32.mrb[0].mxu0
      %v2306 = vadd.f32 %v2158, %v2305
      %v2307 = vpop.f32.mrb[0].mxu0
      %2308 = vmatprep.mubr.f32.mxu0 0.0
      %2309 = vmatmul.mubr.f32.gmra.mrb[0].mxu0 %v2123
      %v2310 = vpop.f32.mrb[0].mxu0
      %v2311 = vadd.f32 %v2158, %v2310
      %v2312 = vpop.f32.mrb[0].mxu0
      %2313 = vmatprep.mubr.f32.mxu0 0.0
      %2314 = vmatmul.mubr.f32.gmra.mrb[0].mxu0 %v2124
      %v2315 = vpop.f32.mrb[0].mxu0
      %v2316 = vadd.f32 %v2158, %v2315
      %v2317 = vpop.f32.mrb[0].mxu0
      %2318 = vmatprep.mubr.f32.mxu0 0.0
      %2319 = vmatmul.mubr.f32.gmra.mrb[0].mxu0 %v2125
      %v2320 = vpop.f32.mrb[0].mxu0
      %v2321 = vadd.f32 %v2158, %v2320
      %v2322 = vpop.f32.mrb[0].mxu0
      %2323 = vmatprep.mubr.f32.mxu0 0.0
      %2324 = vmatmul.mubr.f32.gmra.mrb[0].mxu0 %v2126
      %v2325 = vpop.f32.mrb[0].mxu0
      %v2326 = vadd.f32 %v2158, %v2325
      %v2327 = vpop.f32.mrb[0].mxu0
      %2328 = vmatprep.mubr.f32.mxu0 0.0
      %2329 = vmatmul.mubr.f32.gmra.mrb[0].mxu0 %v2127
      %v2330 = vpop.f32.mrb[0].mxu0
      %v2331 = vadd.f32 %v2158, %v2330
      %v2332 = vpop.f32.mrb[0].mxu0
      %2333 = vmatprep.mubr.f32.mxu0 0.0
      %2334 = vmatmul.mubr.f32.gmra.mrb[0].mxu0 %v2128
      %v2335 = vpop.f32.mrb[0].mxu0
      %v2336 = vadd.f32 %v2158, %v2335
      %v2337 = vpop.f32.mrb[0].mxu0
      %2338 = vmatprep.mubr.f32.mxu0 0.0
      %2339 = vmatmul.mubr.f32.gmra.mrb[0].mxu0 %v2129
      %v2340 = vpop.f32.mrb[0].mxu0
      %v2341 = vadd.f32 %v2158, %v2340
      %v2342 = vpop.f32.mrb[0].mxu0
      %2343 = vmatprep.mubr.f32.mxu0 0.0
      %2344 = vmatmul.mubr.f32.gmra.mrb[0].mxu0 %v2130
      %v2345 = vpop.f32.mrb[0].mxu0
      %v2346 = vadd.f32 %v2158, %v2345
      %v2347 = vpop.f32.mrb[0].mxu0
      %2348 = vmatprep.mubr.f32.mxu0 0.0
      %2349 = vmatmul.mubr.f32.gmra.mrb[0].mxu0 %v2131
      %v2350 = vpop.f32.mrb[0].mxu0
      %v2351 = vadd.f32 %v2158, %v2350
      %v2352 = vpop.f32.mrb[0].mxu0
      %2353 = vmatprep.mubr.f32.mxu0 0.0
      %2354 = vmatmul.mubr.f32.gmra.mrb[0].mxu0 %v2132
      %v2355 = vpop.f32.mrb[0].mxu0
      %v2356 = vadd.f32 %v2158, %v2355
      %v2357 = vpop.f32.mrb[0].mxu0
      %2358 = vmatprep.mubr.f32.mxu0 0.0
      %2359 = vmatmul.mubr.f32.gmra.mrb[0].mxu0 %v2133
      %v2360 = vpop.f32.mrb[0].mxu0
      %v2361 = vadd.f32 %v2158, %v2360
      %v2362 = vpop.f32.mrb[0].mxu0
      %2363 = vmatprep.mubr.f32.mxu0 0.0
      %2364 = vmatmul.mubr.f32.gmra.mrb[0].mxu0 %v2134
      %v2365 = vpop.f32.mrb[0].mxu0
      %v2366 = vadd.f32 %v2158, %v2365
      %v2367 = vpop.f32.mrb[0].mxu0
      %2368 = vmatprep.mubr.f32.mxu0 0.0
      %2369 = vmatmul.mubr.f32.gmra.mrb[0].mxu0 %v2135
      %v2370 = vpop.f32.mrb[0].mxu0
      %v2371 = vadd.f32 %v2158, %v2370
      %v2372 = vpop.f32.mrb[0].mxu0
      %2373 = vmatprep.mubr.f32.mxu0 0.0
      %2374 = vmatmul.mubr.f32.gmra.mrb[0].mxu0 %v2136
      %v2375 = vpop.f32.mrb[0].mxu0
      %v2376 = vadd.f32 %v2158, %v2375
      %v2377 = vpop.f32.mrb[0].mxu0
      %2378 = vmatprep.mubr.f32.mxu0 0.0
      %2379 = vmatmul.mubr.f32.gmra.mrb[0].mxu0 %v2137
      %v2380 = vpop.f32.mrb[0].mxu0
      %v2381 = vadd.f32 %v2158, %v2380
      %v2382 = vpop.f32.mrb[0].mxu0
      %2383 = vdwg.mxu0
      %v2384 = vadd.f32 %v1168, %v2226
      %v2385 = vadd.f32 %v1173, %v2231
      %v2386 = vadd.f32 %v1178, %v2236
      %v2387 = vadd.f32 %v1183, %v2241
      %v2388 = vadd.f32 %v1188, %v2246
      %v2389 = vadd.f32 %v1193, %v2251
      %v2390 = vadd.f32 %v1198, %v2256
      %v2391 = vadd.f32 %v1203, %v2261
      %v2392 = vadd.f32 %v1208, %v2266
      %v2393 = vadd.f32 %v1213, %v2271
      %v2394 = vadd.f32 %v1218, %v2276
      %v2395 = vadd.f32 %v1223, %v2281
      %v2396 = vadd.f32 %v1228, %v2286
      %v2397 = vadd.f32 %v1233, %v2291
      %v2398 = vadd.f32 %v1238, %v2296
      %v2399 = vadd.f32 %v1243, %v2301
      %v2400 = vadd.f32 %v1248, %v2306
      %v2401 = vadd.f32 %v1253, %v2311
      %v2402 = vadd.f32 %v1258, %v2316
      %v2403 = vadd.f32 %v1263, %v2321
      %v2404 = vadd.f32 %v1268, %v2326
      %v2405 = vadd.f32 %v1273, %v2331
      %v2406 = vadd.f32 %v1278, %v2336
      %v2407 = vadd.f32 %v1283, %v2341
      %v2408 = vadd.f32 %v1288, %v2346
      %v2409 = vadd.f32 %v1293, %v2351
      %v2410 = vadd.f32 %v1298, %v2356
      %v2411 = vadd.f32 %v1303, %v2361
      %v2412 = vadd.f32 %v1308, %v2366
      %v2413 = vadd.f32 %v1313, %v2371
      %v2414 = vadd.f32 %v1318, %v2376
      %v2415 = vadd.f32 %v1323, %v2381
      %2416 = vst [vmem:[%s145] sm:$0xff] %v2384
      %2417 = vst [vmem:[%s145 + $0x8] sm:$0xff] %v2385
      %2418 = vst [vmem:[%s145 + $0x10] sm:$0xff] %v2386
      %2419 = vst [vmem:[%s145 + $0x18] sm:$0xff] %v2387
      %2420 = vst [vmem:[%s145 + $0x20] sm:$0xff] %v2388
      %2421 = vst [vmem:[%s145 + $0x28] sm:$0xff] %v2389
      %2422 = vst [vmem:[%s145 + $0x30] sm:$0xff] %v2390
      %2423 = vst [vmem:[%s145 + $0x38] sm:$0xff] %v2391
      %2424 = vst [vmem:[%s145 + $0x40] sm:$0xff] %v2392
      %2425 = vst [vmem:[%s145 + $0x48] sm:$0xff] %v2393
      %2426 = vst [vmem:[%s145 + $0x50] sm:$0xff] %v2394
      %2427 = vst [vmem:[%s145 + $0x58] sm:$0xff] %v2395
      %2428 = vst [vmem:[%s145 + $0x60] sm:$0xff] %v2396
      %2429 = vst [vmem:[%s145 + $0x68] sm:$0xff] %v2397
      %2430 = vst [vmem:[%s145 + $0x70] sm:$0xff] %v2398
      %2431 = vst [vmem:[%s145 + $0x78] sm:$0xff] %v2399
      %2432 = vst [vmem:[%s145 + $0x80] sm:$0xff] %v2400
      %2433 = vst [vmem:[%s145 + $0x88] sm:$0xff] %v2401
      %2434 = vst [vmem:[%s145 + $0x90] sm:$0xff] %v2402
      %2435 = vst [vmem:[%s145 + $0x98] sm:$0xff] %v2403
      %2436 = vst [vmem:[%s145 + $0xa0] sm:$0xff] %v2404
      %2437 = vst [vmem:[%s145 + $0xa8] sm:$0xff] %v2405
      %2438 = vst [vmem:[%s145 + $0xb0] sm:$0xff] %v2406
      %2439 = vst [vmem:[%s145 + $0xb8] sm:$0xff] %v2407
      %2440 = vst [vmem:[%s145 + $0xc0] sm:$0xff] %v2408
      %2441 = vst [vmem:[%s145 + $0xc8] sm:$0xff] %v2409
      %2442 = vst [vmem:[%s145 + $0xd0] sm:$0xff] %v2410
      %2443 = vst [vmem:[%s145 + $0xd8] sm:$0xff] %v2411
      %2444 = vst [vmem:[%s145 + $0xe0] sm:$0xff] %v2412
      %2445 = vst [vmem:[%s145 + $0xe8] sm:$0xff] %v2413
      %2446 = vst [vmem:[%s145 + $0xf0] sm:$0xff] %v2414
      %2447 = vst [vmem:[%s145 + $0xf8] sm:$0xff] %v2415
      %s2448 = smul.u32 32, %s13
      %p2449 = scmp.lt.s32.totalorder %s2448, 63
      %s2450 = scalar_select %p2449, %s2448, 63
      %s2451 = smul.addr %s2450, 8
      %s2452 = scalar_lea.vmem %s2, %s2451
      // Predicated region
      $region29: #{fwd.1} parent=27 // pred_check
        %p2453 = pneg %p78
      $region30: #{fwd.1} parent=27 // pred_check_branch
        %2455 = sbr.rel (%p2453) target = $region32
      $region31: #{fwd.1} parent=27 // pred_region
        %s2456 = smul.u32 32, %s13
      $region32: #{fwd.1} parent=27 // pred_fallthru
        _
    $region28: #{fwd.1} parent=5 // pred_fallthru
      _
    %p2457 = scmp.le.s32.totalorder 2, %s8
    // Predicated region
    $region33: #{fwd.1} parent=5 // pred_check
      %p2458 = pneg %p2457
    $region34: #{fwd.1} parent=5 // pred_check_branch
      %2460 = sbr.rel (%p2458) target = $region36
    $region35: #{fwd.1} parent=5 // pred_region
      %s2461 = ssub.s32 %s8, 2
      // Predicated region
      $region37: #{fwd.1} parent=35 // pred_check
        %p2462 = pneg %p84
      $region38: #{fwd.1} parent=35 // pred_check_branch
        %2464 = sbr.rel (%p2462) target = $region40
      $region39: #{fwd.1} parent=35 // pred_region
        %s2465 = smul.u32 32, %s14
        %p2466 = scmp.lt.s32.totalorder %s2465, 63
        %s2467 = scalar_select %p2466, %s2465, 63
        %s2468 = smul.addr %s2467, 8
        %s2469 = scalar_lea.vmem %s2, %s2468
      $region40: #{fwd.1} parent=35 // pred_fallthru
        _
    $region36: #{fwd.1} parent=5 // pred_fallthru
      _
  $region6: #{fwd.1} parent=0 // loop_footer
    %s12 = sadd.s32 1, %s8
  $region7: #{fwd.1} parent=0 // loop_footer_branch
    %7 = sbr.rel target = $region3
  $region8: #{fwd.1} parent=0 // loop_exit
    _

</llo_original>
